<compile_context>
chip_gen: v6e
topology: v6e:2x2x1
jax: 0.10.0
libtpu: 0.0.40
codegen_flags: <defaults>
</compile_context>

<pallas_src>
import functools

import jax
import jax.numpy as jnp
import numpy as np
from jax.experimental import pallas as pl
from jax.experimental.pallas import tpu as pltpu

LN_EPS = 1e-5  # PyTorch nn.LayerNorm default


def _round_up(x, m):
    return (x + m - 1) // m * m


def mixer_kernel(
    x_ref,      # [Bt, T, Fp]   bf16 activations (feature dim zero-padded)
    w1_ref,     # [Bt, TM, T]   bf16 token-mix Linear1 weight (pre-broadcast)
    b1_ref,     # [TM, 1]       f32
    w2_ref,     # [Bt, T, TM]   bf16 token-mix Linear2 weight (pre-broadcast)
    b2_ref,     # [T, 1]        f32
    w1c_ref,    # [Fp, CMp]     bf16 channel-mix Linear1 weight (pre-transposed, zero-padded)
    b1c_ref,    # [1, CMp]      f32
    w2c_ref,    # [CMp, Fp]     bf16 channel-mix Linear2 weight (pre-transposed, zero-padded)
    fvec_ref,   # [8, Fp]       f32 packed rows: 0=b2c 1=g_t 2=beta_t 3=g_c 4=beta_c
    o_ref,      # [Bt, T, Fp]   bf16
    *,
    f_real,     # true num_features (<= Fp)
):
    bt, t, fp = x_ref.shape
    bf16 = jnp.bfloat16
    f32 = jnp.float32

    xb = x_ref[...]                 # bf16 block (MXU operand)
    x = xb.astype(f32)              # f32 for residual / LayerNorm

    inv_f = jnp.float32(1.0 / f_real)
    # Mask of the real feature lanes. Applied ONCE (to tok + x): tok's padded
    # lanes are polluted by the b1/b2 lane-broadcast; every other LN input
    # already has zero padded lanes, so both LayerNorms run unmasked.
    mask = (jax.lax.broadcasted_iota(jnp.int32, (1, 1, fp), 2) < f_real).astype(f32)

    fvec = fvec_ref[...]
    b2c    = fvec[0:1, :]           # [1, Fp]
    g_t    = fvec[1:2, :][None]     # [1, 1, Fp]
    beta_t = fvec[2:3, :][None]
    g_c    = fvec[3:4, :][None]
    beta_c = fvec[4:5, :][None]

    def ln(v, gamma, beta):
        # v has zero padded feature lanes; biased variance via E[x^2]-mean^2,
        # eps=1e-5 (PyTorch default). Padded gamma/beta are 0 so padded output
        # lanes come out exactly 0.
        mean = jnp.sum(v, axis=-1, keepdims=True) * inv_f
        ex2 = jnp.sum(v * v, axis=-1, keepdims=True) * inv_f
        inv = jax.lax.rsqrt(ex2 - mean * mean + LN_EPS)
        return (v - mean) * inv * gamma + beta

    # ---- token mixing (mix across T), batched MXU matmuls --------------------
    # Batched weights come pre-broadcast from HBM (single-buffered, DMA'd once)
    # instead of a per-step broadcast_in_dim inside the kernel.
    h = jnp.einsum("bmt,btf->bmf", w1_ref[...], xb, preferred_element_type=f32)
    h = jnp.maximum(h + b1_ref[...][None], 0.0)          # [Bt, TM, Fp] f32
    tok = jnp.einsum("bnm,bmf->bnf", w2_ref[...], h.astype(bf16),
                     preferred_element_type=f32)
    tok = tok + b2_ref[...][None]                        # [Bt, T, Fp]

    # ---- residual + LayerNorm over features ----------------------------------
    u = ln((tok + x) * mask, g_t, beta_t)                # padded lanes -> 0

    # ---- channel mixing (mix across F) as one flattened lane-dense matmul ----
    # Zero-cost reshape when T % 8 == 0 (true here); otherwise correct, just a
    # relayout.
    u2 = u.reshape(bt * t, fp)
    h2 = jnp.dot(u2.astype(bf16), w1c_ref[...], preferred_element_type=f32) + b1c_ref[...]
    h2 = jnp.maximum(h2, 0.0)                            # [Bt*T, CMp]
    # TODO(synk): at production F/CM on v7x (64 MiB VMEM), tile the CM dim here
    # (extra "arbitrary" grid axis or pltpu.emit_pipeline) instead of keeping
    # both full channel-mix weights resident.
    ch = jnp.dot(h2.astype(bf16), w2c_ref[...], preferred_element_type=f32) + b2c
    ch = ch.reshape(bt, t, fp)

    # ---- residual + LayerNorm over features ----------------------------------
    o_ref[...] = ln(ch + u, g_c, beta_c).astype(o_ref.dtype)


def _pick_b_tile(B, T, TM, Fp, CMp, vmem_limit_bytes):
    """Largest batch block such that (a) there are >= min(B, 4) grid steps
    (>= 2 per TensorCore on 2-core parts, enough steps to overlap DMA with
    compute) and (b) a rough VMEM footprint fits the budget; prefer blocks
    whose flattened row count b_tile*T is MXU-aligned (multiple of 256)."""
    min_steps = min(B, 4)

    def fits(bt):
        const = ((Fp * CMp + CMp * Fp + 2 * bt * TM * T) * 2      # bf16 weights (single-buffered)
                 + (TM + T + CMp + 8 * Fp) * 4)                   # f32 biases / packed vectors
        act_io = 2 * 2 * (bt * T * Fp) * 2                        # x + out blocks, double-buffered bf16
        live = (bt * T * (4 * Fp + CMp) + bt * TM * Fp) * 4       # f32 in-kernel intermediates
        return const + act_io + live <= 0.7 * vmem_limit_bytes

    cand = [bt for bt in range(1, B + 1)
            if pl.cdiv(B, bt) >= min_steps and fits(bt)]
    if not cand:
        cand = [1]
    aligned = [bt for bt in cand if (bt * T) % 256 == 0]
    return max(aligned) if aligned else max(cand)


def mixer_layer(x, params, *, b_tile=None):
    """x: [B, T, F] float32. params: dict of f32 weights (see init_params).

    Kernel I/O is bf16 (memory-bound layer); the wrapper returns x.dtype."""
    B, T, F = x.shape
    TM = params["w1"].shape[0]
    CM = params["w1c_t"].shape[1]

    Fp = _round_up(F, 128)     # lane-dense activations / output
    CMp = _round_up(CM, 128)   # lane-dense channel-mix hidden

    bf16 = jnp.bfloat16
    f32 = jnp.float32

    # Generation-aware VMEM budget (~96 MiB on 128 MiB v5e/v6e, ~48 MiB on v7x).
    try:
        vmem_cap = pltpu.get_tpu_info().vmem_capacity_bytes
    except Exception:
        vmem_cap = 64 * 1024 * 1024
    vmem_limit = int(vmem_cap * 3 // 4)

    if b_tile is None:
        b_tile = _pick_b_tile(B, T, TM, Fp, CMp, vmem_limit)
    Bp = _round_up(B, b_tile)
    grid_b = Bp // b_tile

    # bf16 activation I/O: halves HBM traffic for the kernel.
    xp = jnp.pad(x.astype(bf16), ((0, Bp - B), (0, 0), (0, Fp - F)))

    # bf16 MXU weights. Token-mix weights are pre-broadcast to the batch block
    # in HBM so the kernel never materializes a per-step broadcast_in_dim.
    w1b = jnp.broadcast_to(params["w1"].astype(bf16)[None], (b_tile, TM, T))
    w2b = jnp.broadcast_to(params["w2"].astype(bf16)[None], (b_tile, T, TM))
    b1 = params["b1"].astype(f32)
    b2 = params["b2"].astype(f32)
    w1c = jnp.pad(params["w1c_t"], ((0, Fp - F), (0, CMp - CM))).astype(bf16)
    w2c = jnp.pad(params["w2c_t"], ((0, CMp - CM), (0, Fp - F))).astype(bf16)
    b1c = jnp.pad(params["b1c"], ((0, 0), (0, CMp - CM))).astype(f32)

    def pad_f(v):
        return jnp.pad(v, ((0, 0), (0, Fp - F)))

    # Pack the five [1, F] vectors into one [8, Fp] slab (padded gamma/beta rows
    # are zero, so padded output lanes come out exactly 0). b1/b2 stay as tiny
    # separate inputs: with Buffered(1) they cost one buffer + one DMA total,
    # and folding them into the slab would need an in-kernel lane->sublane
    # relayout every step.
    fvec = jnp.concatenate(
        [pad_f(params["b2c"]), pad_f(params["g_t"]), pad_f(params["beta_t"]),
         pad_f(params["g_c"]), pad_f(params["beta_c"]),
         jnp.zeros((3, Fp), f32)], axis=0).astype(f32)

    kernel = functools.partial(mixer_kernel, f_real=F)

    flops = Bp * 4 * TM * T * Fp + 4 * Bp * T * Fp * CMp
    bytes_accessed = (2 * Bp * T * Fp) * 2 \
        + (2 * b_tile * TM * T + Fp * CMp + CMp * Fp) * 2 \
        + (TM + T + CMp + 8 * Fp) * 4

    def run(const_mode):
        def cspec(shape):
            # Constant (revisited) blocks: index_map always (0, ..., 0).
            if const_mode is None:
                return pl.BlockSpec(shape, lambda i: (0,) * len(shape))
            return pl.BlockSpec(shape, lambda i: (0,) * len(shape),
                                pipeline_mode=const_mode)

        grid_spec = pltpu.PrefetchScalarGridSpec(
            num_scalar_prefetch=0,
            grid=(grid_b,),
            in_specs=[
                pl.BlockSpec((b_tile, T, Fp), lambda i: (i, 0, 0)),   # x block
                cspec((b_tile, TM, T)),                               # w1 (batched)
                cspec((TM, 1)),                                       # b1
                cspec((b_tile, T, TM)),                               # w2 (batched)
                cspec((T, 1)),                                        # b2
                cspec((Fp, CMp)),                                     # w1c^T
                cspec((1, CMp)),                                      # b1c
                cspec((CMp, Fp)),                                     # w2c^T
                cspec((8, Fp)),                                       # packed f-vectors
            ],
            out_specs=pl.BlockSpec((b_tile, T, Fp), lambda i: (i, 0, 0)),
        )
        return pl.pallas_call(
            kernel,
            out_shape=jax.ShapeDtypeStruct((Bp, T, Fp), bf16),
            grid_spec=grid_spec,
            compiler_params=pltpu.CompilerParams(
                dimension_semantics=("parallel",),
                vmem_limit_bytes=vmem_limit),
            cost_estimate=pl.CostEstimate(
                flops=flops, transcendentals=2 * Bp * T,
                bytes_accessed=bytes_accessed),
        )(xp, w1b, b1, w2b, b2, w1c, b1c, w2c, fvec)

    try:
        # Single pipeline buffer for constant weight blocks (they are only
        # DMA'd once; the default second buffer is pure VMEM waste).
        out = run(pl.Buffered(1))
    except Exception:
        # Fallback for jax builds without BlockSpec.pipeline_mode support.
        out = run(None)

    return out[:B, :, :F].astype(x.dtype)


def init_params(key, num_features, num_tokens, token_mix_dim, channel_mix_dim):
    ks = jax.random.split(key, 8)
    f32 = jnp.float32

    def lin(k, fan_in, shape):
        # deterministic, nn.Linear-style uniform init
        bound = 1.0 / np.sqrt(fan_in)
        return jax.random.uniform(k, shape, f32, -bound, bound)

    # token mixing: Linear(T -> TM), Linear(TM -> T)
    w1 = lin(ks[0], num_tokens, (token_mix_dim, num_tokens))
    b1 = lin(ks[1], num_tokens, (token_mix_dim, 1))
    w2 = lin(ks[2], token_mix_dim, (num_tokens, token_mix_dim))
    b2 = lin(ks[3], token_mix_dim, (num_tokens, 1))
    # channel mixing: Linear(F -> CM), Linear(CM -> F) — stored pre-transposed
    w1c_t = lin(ks[4], num_features, (num_features, channel_mix_dim))
    b1c = lin(ks[5], num_features, (1, channel_mix_dim))
    w2c_t = lin(ks[6], channel_mix_dim, (channel_mix_dim, num_features))
    b2c = lin(ks[7], channel_mix_dim, (1, num_features))
    return dict(
        w1=w1, b1=b1, w2=w2, b2=b2,
        w1c_t=w1c_t, b1c=b1c, w2c_t=w2c_t, b2c=b2c,
        g_t=jnp.ones((1, num_features), f32),
        beta_t=jnp.zeros((1, num_features), f32),
        g_c=jnp.ones((1, num_features), f32),
        beta_c=jnp.zeros((1, num_features), f32),
    )


def mixer_reference(x, p):
    """Plain-JAX mirror of the PyTorch forward (eval mode), f32 end-to-end."""
    def ln(v, g, b):
        m = jnp.mean(v, -1, keepdims=True)
        var = jnp.mean((v - m) ** 2, -1, keepdims=True)
        return (v - m) / jnp.sqrt(var + LN_EPS) * g + b

    xt = jnp.swapaxes(x, 1, 2)                                   # [B, F, T]
    h = jnp.maximum(xt @ p["w1"].T + p["b1"][:, 0], 0.0)         # [B, F, TM]
    tok = h @ p["w2"].T + p["b2"][:, 0]                          # [B, F, T]
    tok = jnp.swapaxes(tok, 1, 2)                                # [B, T, F]
    u = ln(tok + x, p["g_t"], p["beta_t"])
    h2 = jnp.maximum(u @ p["w1c_t"] + p["b1c"], 0.0)             # [B, T, CM]
    ch = h2 @ p["w2c_t"] + p["b2c"]                              # [B, T, F]
    return ln(ch + u, p["g_c"], p["beta_c"])


if __name__ == "__main__":
    B, T, F = 8, 8, 32          # batch, num_tokens, num_features
    TM, CM = 16, 64             # token_mix_dim, channel_mix_dim

    key = jax.random.PRNGKey(0)
    kx, kp = jax.random.split(key)
    x = jax.random.normal(kx, (B, T, F), jnp.float32)
    params = init_params(kp, F, T, TM, CM)

    out = mixer_layer(x, params)     # b_tile auto-picked -> 4 grid steps here
    out = jax.block_until_ready(out)

    ref = mixer_reference(x, params)
    # bf16 activation I/O + bf16 MXU operands (f32 accumulation) -> loosened
    # tolerance vs the f32 reference.
    np.testing.assert_allclose(np.asarray(out), np.asarray(ref), rtol=5e-2, atol=5e-2)

    print("KERNEL_OK")
</pallas_src>

<mosaic_0001>
module attributes {stable_mosaic.version = 11 : i64} {
  func.func @mixer_kernel(%arg0: i32, %arg1: memref<2x8x128xbf16, #tpu.memory_space<vmem>>, %arg2: memref<2x16x8xbf16, #tpu.memory_space<vmem>>, %arg3: memref<16x1xf32, #tpu.memory_space<vmem>>, %arg4: memref<2x8x16xbf16, #tpu.memory_space<vmem>>, %arg5: memref<8x1xf32, #tpu.memory_space<vmem>>, %arg6: memref<128x128xbf16, #tpu.memory_space<vmem>>, %arg7: memref<1x128xf32, #tpu.memory_space<vmem>>, %arg8: memref<128x128xbf16, #tpu.memory_space<vmem>>, %arg9: memref<8x128xf32, #tpu.memory_space<vmem>>, %arg10: memref<2x8x128xbf16, #tpu.memory_space<vmem>>) attributes {dimension_semantics = [#tpu.dimension_semantics<parallel>], iteration_bounds = array<i64: 4>, scalar_prefetch = 0 : i64, scratch_operands = 0 : i64, tpu.core_type = #tpu.core_type<tc>, window_params = [{transform_indices = @transform_0, window_bounds = array<i64: 2, 8, 128>}, {pipeline_mode = #tpu.pipeline_mode<synchronous>, transform_indices = @transform_1, window_bounds = array<i64: 2, 16, 8>}, {pipeline_mode = #tpu.pipeline_mode<synchronous>, transform_indices = @transform_2, window_bounds = array<i64: 16, 1>}, {pipeline_mode = #tpu.pipeline_mode<synchronous>, transform_indices = @transform_3, window_bounds = array<i64: 2, 8, 16>}, {pipeline_mode = #tpu.pipeline_mode<synchronous>, transform_indices = @transform_4, window_bounds = array<i64: 8, 1>}, {pipeline_mode = #tpu.pipeline_mode<synchronous>, transform_indices = @transform_5, window_bounds = array<i64: 128, 128>}, {pipeline_mode = #tpu.pipeline_mode<synchronous>, transform_indices = @transform_6, window_bounds = array<i64: 1, 128>}, {pipeline_mode = #tpu.pipeline_mode<synchronous>, transform_indices = @transform_7, window_bounds = array<i64: 128, 128>}, {pipeline_mode = #tpu.pipeline_mode<synchronous>, transform_indices = @transform_8, window_bounds = array<i64: 8, 128>}, {transform_indices = @transform_9, window_bounds = array<i64: 2, 8, 128>}]} {
    %c0 = arith.constant 0 : index
    %c0_0 = arith.constant 0 : index
    %c0_1 = arith.constant 0 : index
    %0 = vector.load %arg1[%c0, %c0_0, %c0_1] : memref<2x8x128xbf16, #tpu.memory_space<vmem>>, vector<2x8x128xbf16>
    %1 = arith.extf %0 : vector<2x8x128xbf16> to vector<2x8x128xf32>
    %2 = tpu.iota {dimensions = array<i32: 2>} : vector<1x1x128xi32>
    %c32_i32 = arith.constant 32 : i32
    %3 = vector.broadcast %c32_i32 : i32 to vector<1x1x128xi32>
    %4 = arith.cmpi slt, %2, %3 : vector<1x1x128xi32>
    %5 = arith.extui %4 : vector<1x1x128xi1> to vector<1x1x128xi32>
    %6 = arith.sitofp %5 : vector<1x1x128xi32> to vector<1x1x128xf32>
    %c0_2 = arith.constant 0 : index
    %c0_3 = arith.constant 0 : index
    %7 = vector.load %arg9[%c0_2, %c0_3] : memref<8x128xf32, #tpu.memory_space<vmem>>, vector<8x128xf32>
    %8 = vector.extract_strided_slice %7 {offsets = [0, 0], sizes = [1, 128], strides = [1, 1]} : vector<8x128xf32> to vector<1x128xf32>
    %9 = vector.extract_strided_slice %7 {offsets = [1, 0], sizes = [1, 128], strides = [1, 1]} : vector<8x128xf32> to vector<1x128xf32>
    %10 = vector.shape_cast %9 : vector<1x128xf32> to vector<1x1x128xf32>
    %11 = vector.extract_strided_slice %7 {offsets = [2, 0], sizes = [1, 128], strides = [1, 1]} : vector<8x128xf32> to vector<1x128xf32>
    %12 = vector.shape_cast %11 : vector<1x128xf32> to vector<1x1x128xf32>
    %13 = vector.extract_strided_slice %7 {offsets = [3, 0], sizes = [1, 128], strides = [1, 1]} : vector<8x128xf32> to vector<1x128xf32>
    %14 = vector.shape_cast %13 : vector<1x128xf32> to vector<1x1x128xf32>
    %15 = vector.extract_strided_slice %7 {offsets = [4, 0], sizes = [1, 128], strides = [1, 1]} : vector<8x128xf32> to vector<1x128xf32>
    %16 = vector.shape_cast %15 : vector<1x128xf32> to vector<1x1x128xf32>
    %c0_4 = arith.constant 0 : index
    %c0_5 = arith.constant 0 : index
    %c0_6 = arith.constant 0 : index
    %17 = vector.load %arg2[%c0_4, %c0_5, %c0_6] : memref<2x16x8xbf16, #tpu.memory_space<vmem>>, vector<2x16x8xbf16>
    "tpu.trace_start"() <{level = 10 : i32, message = "bmt,btf->bmf"}> : () -> ()
    %cst = arith.constant dense<0.000000e+00> : vector<2x16x128xf32>
    %18 = tpu.matmul %17, %0, %cst {dimension_numbers = #tpu.dot_dimension_numbers<[2], [1], [1], [2], [0, 0, 0, 1, 1, 2], [0], [0]>} : vector<2x16x8xbf16>, vector<2x8x128xbf16>, vector<2x16x128xf32> -> vector<2x16x128xf32>
    "tpu.trace_stop"() : () -> ()
    %c0_7 = arith.constant 0 : index
    %c0_8 = arith.constant 0 : index
    %19 = vector.load %arg3[%c0_7, %c0_8] : memref<16x1xf32, #tpu.memory_space<vmem>>, vector<16x1xf32>
    %20 = vector.shape_cast %19 : vector<16x1xf32> to vector<1x16x1xf32>
    %21 = vector.broadcast %20 : vector<1x16x1xf32> to vector<2x16x128xf32>
    %22 = arith.addf %18, %21 : vector<2x16x128xf32>
    %cst_9 = arith.constant 0.000000e+00 : f32
    %23 = vector.broadcast %cst_9 : f32 to vector<2x16x128xf32>
    %24 = arith.maximumf %22, %23 : vector<2x16x128xf32>
    %c0_10 = arith.constant 0 : index
    %c0_11 = arith.constant 0 : index
    %c0_12 = arith.constant 0 : index
    %25 = vector.load %arg4[%c0_10, %c0_11, %c0_12] : memref<2x8x16xbf16, #tpu.memory_space<vmem>>, vector<2x8x16xbf16>
    %26 = arith.truncf %24 : vector<2x16x128xf32> to vector<2x16x128xbf16>
    "tpu.trace_start"() <{level = 10 : i32, message = "bnm,bmf->bnf"}> : () -> ()
    %cst_13 = arith.constant dense<0.000000e+00> : vector<2x8x128xf32>
    %27 = tpu.matmul %25, %26, %cst_13 {dimension_numbers = #tpu.dot_dimension_numbers<[2], [1], [1], [2], [0, 0, 0, 1, 1, 2], [0], [0]>} : vector<2x8x16xbf16>, vector<2x16x128xbf16>, vector<2x8x128xf32> -> vector<2x8x128xf32>
    "tpu.trace_stop"() : () -> ()
    %c0_14 = arith.constant 0 : index
    %c0_15 = arith.constant 0 : index
    %28 = vector.load %arg5[%c0_14, %c0_15] : memref<8x1xf32, #tpu.memory_space<vmem>>, vector<8x1xf32>
    %29 = vector.shape_cast %28 : vector<8x1xf32> to vector<1x8x1xf32>
    %30 = vector.broadcast %29 : vector<1x8x1xf32> to vector<2x8x128xf32>
    %31 = arith.addf %27, %30 : vector<2x8x128xf32>
    %32 = arith.addf %31, %1 : vector<2x8x128xf32>
    %33 = vector.broadcast %6 : vector<1x1x128xf32> to vector<2x8x128xf32>
    %34 = arith.mulf %32, %33 : vector<2x8x128xf32>
    %cst_16 = arith.constant dense<0.000000e+00> : vector<2x8xf32>
    %35 = vector.multi_reduction <add>, %34, %cst_16 [2] : vector<2x8x128xf32> to vector<2x8xf32>
    %36 = vector.shape_cast %35 : vector<2x8xf32> to vector<2x8x1xf32>
    %cst_17 = arith.constant 3.125000e-02 : f32
    %37 = vector.broadcast %cst_17 : f32 to vector<2x8x1xf32>
    %38 = arith.mulf %36, %37 : vector<2x8x1xf32>
    %39 = arith.mulf %34, %34 : vector<2x8x128xf32>
    %cst_18 = arith.constant dense<0.000000e+00> : vector<2x8xf32>
    %40 = vector.multi_reduction <add>, %39, %cst_18 [2] : vector<2x8x128xf32> to vector<2x8xf32>
    %41 = vector.shape_cast %40 : vector<2x8xf32> to vector<2x8x1xf32>
    %cst_19 = arith.constant 3.125000e-02 : f32
    %42 = vector.broadcast %cst_19 : f32 to vector<2x8x1xf32>
    %43 = arith.mulf %41, %42 : vector<2x8x1xf32>
    %44 = arith.mulf %38, %38 : vector<2x8x1xf32>
    %45 = arith.subf %43, %44 : vector<2x8x1xf32>
    %cst_20 = arith.constant 9.99999974E-6 : f32
    %46 = vector.broadcast %cst_20 : f32 to vector<2x8x1xf32>
    %47 = arith.addf %45, %46 : vector<2x8x1xf32>
    %48 = math.rsqrt %47 : vector<2x8x1xf32>
    %49 = vector.broadcast %38 : vector<2x8x1xf32> to vector<2x8x128xf32>
    %50 = arith.subf %34, %49 : vector<2x8x128xf32>
    %51 = vector.broadcast %48 : vector<2x8x1xf32> to vector<2x8x128xf32>
    %52 = arith.mulf %50, %51 : vector<2x8x128xf32>
    %53 = vector.broadcast %10 : vector<1x1x128xf32> to vector<2x8x128xf32>
    %54 = arith.mulf %52, %53 : vector<2x8x128xf32>
    %55 = vector.broadcast %12 : vector<1x1x128xf32> to vector<2x8x128xf32>
    %56 = arith.addf %54, %55 : vector<2x8x128xf32>
    %57 = vector.shape_cast %56 : vector<2x8x128xf32> to vector<16x128xf32>
    %58 = arith.truncf %57 : vector<16x128xf32> to vector<16x128xbf16>
    %c0_21 = arith.constant 0 : index
    %c0_22 = arith.constant 0 : index
    %59 = vector.load %arg6[%c0_21, %c0_22] : memref<128x128xbf16, #tpu.memory_space<vmem>>, vector<128x128xbf16>
    %cst_23 = arith.constant dense<0.000000e+00> : vector<16x128xf32>
    %60 = tpu.matmul %58, %59, %cst_23 {dimension_numbers = #tpu.dot_dimension_numbers<[1], [0], [0], [1], [0, 0, 1, 1], [], []>} : vector<16x128xbf16>, vector<128x128xbf16>, vector<16x128xf32> -> vector<16x128xf32>
    %c0_24 = arith.constant 0 : index
    %c0_25 = arith.constant 0 : index
    %61 = vector.load %arg7[%c0_24, %c0_25] : memref<1x128xf32, #tpu.memory_space<vmem>>, vector<1x128xf32>
    %62 = vector.broadcast %61 : vector<1x128xf32> to vector<16x128xf32>
    %63 = arith.addf %60, %62 : vector<16x128xf32>
    %cst_26 = arith.constant 0.000000e+00 : f32
    %64 = vector.broadcast %cst_26 : f32 to vector<16x128xf32>
    %65 = arith.maximumf %63, %64 : vector<16x128xf32>
    %66 = arith.truncf %65 : vector<16x128xf32> to vector<16x128xbf16>
    %c0_27 = arith.constant 0 : index
    %c0_28 = arith.constant 0 : index
    %67 = vector.load %arg8[%c0_27, %c0_28] : memref<128x128xbf16, #tpu.memory_space<vmem>>, vector<128x128xbf16>
    %cst_29 = arith.constant dense<0.000000e+00> : vector<16x128xf32>
    %68 = tpu.matmul %66, %67, %cst_29 {dimension_numbers = #tpu.dot_dimension_numbers<[1], [0], [0], [1], [0, 0, 1, 1], [], []>} : vector<16x128xbf16>, vector<128x128xbf16>, vector<16x128xf32> -> vector<16x128xf32>
    %69 = vector.broadcast %8 : vector<1x128xf32> to vector<16x128xf32>
    %70 = arith.addf %68, %69 : vector<16x128xf32>
    %71 = vector.shape_cast %70 : vector<16x128xf32> to vector<2x8x128xf32>
    %72 = arith.addf %71, %56 : vector<2x8x128xf32>
    %cst_30 = arith.constant dense<0.000000e+00> : vector<2x8xf32>
    %73 = vector.multi_reduction <add>, %72, %cst_30 [2] : vector<2x8x128xf32> to vector<2x8xf32>
    %74 = vector.shape_cast %73 : vector<2x8xf32> to vector<2x8x1xf32>
    %cst_31 = arith.constant 3.125000e-02 : f32
    %75 = vector.broadcast %cst_31 : f32 to vector<2x8x1xf32>
    %76 = arith.mulf %74, %75 : vector<2x8x1xf32>
    %77 = arith.mulf %72, %72 : vector<2x8x128xf32>
    %cst_32 = arith.constant dense<0.000000e+00> : vector<2x8xf32>
    %78 = vector.multi_reduction <add>, %77, %cst_32 [2] : vector<2x8x128xf32> to vector<2x8xf32>
    %79 = vector.shape_cast %78 : vector<2x8xf32> to vector<2x8x1xf32>
    %cst_33 = arith.constant 3.125000e-02 : f32
    %80 = vector.broadcast %cst_33 : f32 to vector<2x8x1xf32>
    %81 = arith.mulf %79, %80 : vector<2x8x1xf32>
    %82 = arith.mulf %76, %76 : vector<2x8x1xf32>
    %83 = arith.subf %81, %82 : vector<2x8x1xf32>
    %cst_34 = arith.constant 9.99999974E-6 : f32
    %84 = vector.broadcast %cst_34 : f32 to vector<2x8x1xf32>
    %85 = arith.addf %83, %84 : vector<2x8x1xf32>
    %86 = math.rsqrt %85 : vector<2x8x1xf32>
    %87 = vector.broadcast %76 : vector<2x8x1xf32> to vector<2x8x128xf32>
    %88 = arith.subf %72, %87 : vector<2x8x128xf32>
    %89 = vector.broadcast %86 : vector<2x8x1xf32> to vector<2x8x128xf32>
    %90 = arith.mulf %88, %89 : vector<2x8x128xf32>
    %91 = vector.broadcast %14 : vector<1x1x128xf32> to vector<2x8x128xf32>
    %92 = arith.mulf %90, %91 : vector<2x8x128xf32>
    %93 = vector.broadcast %16 : vector<1x1x128xf32> to vector<2x8x128xf32>
    %94 = arith.addf %92, %93 : vector<2x8x128xf32>
    %95 = arith.truncf %94 : vector<2x8x128xf32> to vector<2x8x128xbf16>
    %c0_35 = arith.constant 0 : index
    %c0_36 = arith.constant 0 : index
    %c0_37 = arith.constant 0 : index
    %96 = vector.load %arg10[%c0_35, %c0_36, %c0_37] : memref<2x8x128xbf16, #tpu.memory_space<vmem>>, vector<2x8x128xbf16>
    tpu.vector_store %arg10[%c0_35, %c0_36, %c0_37], %95 {strides = array<i32>} : memref<2x8x128xbf16, #tpu.memory_space<vmem>>, vector<2x8x128xbf16>,
    return
  }
  func.func @transform_0(%arg0: i32) -> (i32, i32, i32) {
    %c0_i32 = arith.constant 0 : i32
    %c0_i32_0 = arith.constant 0 : i32
    %c0_i32_1 = arith.constant 0 : i32
    return %arg0, %c0_i32, %c0_i32_0 : i32, i32, i32
  }
  func.func @transform_1(%arg0: i32) -> (i32, i32, i32) {
    %c0_i32 = arith.constant 0 : i32
    %c0_i32_0 = arith.constant 0 : i32
    %c0_i32_1 = arith.constant 0 : i32
    %c0_i32_2 = arith.constant 0 : i32
    return %c0_i32, %c0_i32_0, %c0_i32_1 : i32, i32, i32
  }
  func.func @transform_2(%arg0: i32) -> (i32, i32) {
    %c0_i32 = arith.constant 0 : i32
    %c0_i32_0 = arith.constant 0 : i32
    %c0_i32_1 = arith.constant 0 : i32
    return %c0_i32, %c0_i32_0 : i32, i32
  }
  func.func @transform_3(%arg0: i32) -> (i32, i32, i32) {
    %c0_i32 = arith.constant 0 : i32
    %c0_i32_0 = arith.constant 0 : i32
    %c0_i32_1 = arith.constant 0 : i32
    %c0_i32_2 = arith.constant 0 : i32
    return %c0_i32, %c0_i32_0, %c0_i32_1 : i32, i32, i32
  }
  func.func @transform_4(%arg0: i32) -> (i32, i32) {
    %c0_i32 = arith.constant 0 : i32
    %c0_i32_0 = arith.constant 0 : i32
    %c0_i32_1 = arith.constant 0 : i32
    return %c0_i32, %c0_i32_0 : i32, i32
  }
  func.func @transform_5(%arg0: i32) -> (i32, i32) {
    %c0_i32 = arith.constant 0 : i32
    %c0_i32_0 = arith.constant 0 : i32
    %c0_i32_1 = arith.constant 0 : i32
    return %c0_i32, %c0_i32_0 : i32, i32
  }
  func.func @transform_6(%arg0: i32) -> (i32, i32) {
    %c0_i32 = arith.constant 0 : i32
    %c0_i32_0 = arith.constant 0 : i32
    %c0_i32_1 = arith.constant 0 : i32
    return %c0_i32, %c0_i32_0 : i32, i32
  }
  func.func @transform_7(%arg0: i32) -> (i32, i32) {
    %c0_i32 = arith.constant 0 : i32
    %c0_i32_0 = arith.constant 0 : i32
    %c0_i32_1 = arith.constant 0 : i32
    return %c0_i32, %c0_i32_0 : i32, i32
  }
  func.func @transform_8(%arg0: i32) -> (i32, i32) {
    %c0_i32 = arith.constant 0 : i32
    %c0_i32_0 = arith.constant 0 : i32
    %c0_i32_1 = arith.constant 0 : i32
    return %c0_i32, %c0_i32_0 : i32, i32
  }
  func.func @transform_9(%arg0: i32) -> (i32, i32, i32) {
    %c0_i32 = arith.constant 0 : i32
    %c0_i32_0 = arith.constant 0 : i32
    %c0_i32_1 = arith.constant 0 : i32
    return %arg0, %c0_i32, %c0_i32_0 : i32, i32, i32
  }
}

module attributes {stable_mosaic.version = 11 : i64} {
  func.func @mixer_kernel(%arg0: i32, %arg1: memref<2x8x128xbf16, #tpu.memory_space<vmem>>, %arg2: memref<2x16x8xbf16, #tpu.memory_space<vmem>>, %arg3: memref<16x1xf32, #tpu.memory_space<vmem>>, %arg4: memref<2x8x16xbf16, #tpu.memory_space<vmem>>, %arg5: memref<8x1xf32, #tpu.memory_space<vmem>>, %arg6: memref<128x128xbf16, #tpu.memory_space<vmem>>, %arg7: memref<1x128xf32, #tpu.memory_space<vmem>>, %arg8: memref<128x128xbf16, #tpu.memory_space<vmem>>, %arg9: memref<8x128xf32, #tpu.memory_space<vmem>>, %arg10: memref<2x8x128xbf16, #tpu.memory_space<vmem>>) attributes {dimension_semantics = [#tpu.dimension_semantics<parallel>], iteration_bounds = array<i64: 4>, scalar_prefetch = 0 : i64, scratch_operands = 0 : i64, tpu.core_type = #tpu.core_type<tc>, window_params = [{transform_indices = @transform_0, window_bounds = array<i64: 2, 8, 128>}, {pipeline_mode = #tpu.pipeline_mode<synchronous>, transform_indices = @transform_1, window_bounds = array<i64: 2, 16, 8>}, {pipeline_mode = #tpu.pipeline_mode<synchronous>, transform_indices = @transform_2, window_bounds = array<i64: 16, 1>}, {pipeline_mode = #tpu.pipeline_mode<synchronous>, transform_indices = @transform_3, window_bounds = array<i64: 2, 8, 16>}, {pipeline_mode = #tpu.pipeline_mode<synchronous>, transform_indices = @transform_4, window_bounds = array<i64: 8, 1>}, {pipeline_mode = #tpu.pipeline_mode<synchronous>, transform_indices = @transform_5, window_bounds = array<i64: 128, 128>}, {pipeline_mode = #tpu.pipeline_mode<synchronous>, transform_indices = @transform_6, window_bounds = array<i64: 1, 128>}, {pipeline_mode = #tpu.pipeline_mode<synchronous>, transform_indices = @transform_7, window_bounds = array<i64: 128, 128>}, {pipeline_mode = #tpu.pipeline_mode<synchronous>, transform_indices = @transform_8, window_bounds = array<i64: 8, 128>}, {transform_indices = @transform_9, window_bounds = array<i64: 2, 8, 128>}]} {
    %c0 = arith.constant 0 : index
    %c0_0 = arith.constant 0 : index
    %c0_1 = arith.constant 0 : index
    %0 = vector.load %arg1[%c0, %c0_0, %c0_1] : memref<2x8x128xbf16, #tpu.memory_space<vmem>>, vector<2x8x128xbf16>
    %1 = arith.extf %0 : vector<2x8x128xbf16> to vector<2x8x128xf32>
    %2 = tpu.iota {dimensions = array<i32: 2>} : vector<1x1x128xi32>
    %c32_i32 = arith.constant 32 : i32
    %3 = vector.broadcast %c32_i32 : i32 to vector<1x1x128xi32>
    %4 = arith.cmpi slt, %2, %3 : vector<1x1x128xi32>
    %5 = arith.extui %4 : vector<1x1x128xi1> to vector<1x1x128xi32>
    %6 = arith.sitofp %5 : vector<1x1x128xi32> to vector<1x1x128xf32>
    %c0_2 = arith.constant 0 : index
    %c0_3 = arith.constant 0 : index
    %7 = vector.load %arg9[%c0_2, %c0_3] : memref<8x128xf32, #tpu.memory_space<vmem>>, vector<8x128xf32>
    %8 = vector.extract_strided_slice %7 {offsets = [0, 0], sizes = [1, 128], strides = [1, 1]} : vector<8x128xf32> to vector<1x128xf32>
    %9 = vector.extract_strided_slice %7 {offsets = [1, 0], sizes = [1, 128], strides = [1, 1]} : vector<8x128xf32> to vector<1x128xf32>
    %10 = vector.shape_cast %9 : vector<1x128xf32> to vector<1x1x128xf32>
    %11 = vector.extract_strided_slice %7 {offsets = [2, 0], sizes = [1, 128], strides = [1, 1]} : vector<8x128xf32> to vector<1x128xf32>
    %12 = vector.shape_cast %11 : vector<1x128xf32> to vector<1x1x128xf32>
    %13 = vector.extract_strided_slice %7 {offsets = [3, 0], sizes = [1, 128], strides = [1, 1]} : vector<8x128xf32> to vector<1x128xf32>
    %14 = vector.shape_cast %13 : vector<1x128xf32> to vector<1x1x128xf32>
    %15 = vector.extract_strided_slice %7 {offsets = [4, 0], sizes = [1, 128], strides = [1, 1]} : vector<8x128xf32> to vector<1x128xf32>
    %16 = vector.shape_cast %15 : vector<1x128xf32> to vector<1x1x128xf32>
    %c0_4 = arith.constant 0 : index
    %c0_5 = arith.constant 0 : index
    %c0_6 = arith.constant 0 : index
    %17 = vector.load %arg2[%c0_4, %c0_5, %c0_6] : memref<2x16x8xbf16, #tpu.memory_space<vmem>>, vector<2x16x8xbf16>
    "tpu.trace_start"() <{level = 10 : i32, message = "bmt,btf->bmf"}> : () -> ()
    %cst = arith.constant dense<0.000000e+00> : vector<2x16x128xf32>
    %18 = tpu.matmul %17, %0, %cst {dimension_numbers = #tpu.dot_dimension_numbers<[2], [1], [1], [2], [0, 0, 0, 1, 1, 2], [0], [0]>} : vector<2x16x8xbf16>, vector<2x8x128xbf16>, vector<2x16x128xf32> -> vector<2x16x128xf32>
    "tpu.trace_stop"() : () -> ()
    %c0_7 = arith.constant 0 : index
    %c0_8 = arith.constant 0 : index
    %19 = vector.load %arg3[%c0_7, %c0_8] : memref<16x1xf32, #tpu.memory_space<vmem>>, vector<16x1xf32>
    %20 = vector.shape_cast %19 : vector<16x1xf32> to vector<1x16x1xf32>
    %21 = vector.broadcast %20 : vector<1x16x1xf32> to vector<2x16x128xf32>
    %22 = arith.addf %18, %21 : vector<2x16x128xf32>
    %cst_9 = arith.constant 0.000000e+00 : f32
    %23 = vector.broadcast %cst_9 : f32 to vector<2x16x128xf32>
    %24 = arith.maximumf %22, %23 : vector<2x16x128xf32>
    %c0_10 = arith.constant 0 : index
    %c0_11 = arith.constant 0 : index
    %c0_12 = arith.constant 0 : index
    %25 = vector.load %arg4[%c0_10, %c0_11, %c0_12] : memref<2x8x16xbf16, #tpu.memory_space<vmem>>, vector<2x8x16xbf16>
    %26 = arith.truncf %24 : vector<2x16x128xf32> to vector<2x16x128xbf16>
    "tpu.trace_start"() <{level = 10 : i32, message = "bnm,bmf->bnf"}> : () -> ()
    %cst_13 = arith.constant dense<0.000000e+00> : vector<2x8x128xf32>
    %27 = tpu.matmul %25, %26, %cst_13 {dimension_numbers = #tpu.dot_dimension_numbers<[2], [1], [1], [2], [0, 0, 0, 1, 1, 2], [0], [0]>} : vector<2x8x16xbf16>, vector<2x16x128xbf16>, vector<2x8x128xf32> -> vector<2x8x128xf32>
    "tpu.trace_stop"() : () -> ()
    %c0_14 = arith.constant 0 : index
    %c0_15 = arith.constant 0 : index
    %28 = vector.load %arg5[%c0_14, %c0_15] : memref<8x1xf32, #tpu.memory_space<vmem>>, vector<8x1xf32>
    %29 = vector.shape_cast %28 : vector<8x1xf32> to vector<1x8x1xf32>
    %30 = vector.broadcast %29 : vector<1x8x1xf32> to vector<2x8x128xf32>
    %31 = arith.addf %27, %30 : vector<2x8x128xf32>
    %32 = arith.addf %31, %1 : vector<2x8x128xf32>
    %33 = vector.broadcast %6 : vector<1x1x128xf32> to vector<2x8x128xf32>
    %34 = arith.mulf %32, %33 : vector<2x8x128xf32>
    %cst_16 = arith.constant dense<0.000000e+00> : vector<2x8xf32>
    %35 = vector.multi_reduction <add>, %34, %cst_16 [2] : vector<2x8x128xf32> to vector<2x8xf32>
    %36 = vector.shape_cast %35 : vector<2x8xf32> to vector<2x8x1xf32>
    %cst_17 = arith.constant 3.125000e-02 : f32
    %37 = vector.broadcast %cst_17 : f32 to vector<2x8x1xf32>
    %38 = arith.mulf %36, %37 : vector<2x8x1xf32>
    %39 = arith.mulf %34, %34 : vector<2x8x128xf32>
    %cst_18 = arith.constant dense<0.000000e+00> : vector<2x8xf32>
    %40 = vector.multi_reduction <add>, %39, %cst_18 [2] : vector<2x8x128xf32> to vector<2x8xf32>
    %41 = vector.shape_cast %40 : vector<2x8xf32> to vector<2x8x1xf32>
    %cst_19 = arith.constant 3.125000e-02 : f32
    %42 = vector.broadcast %cst_19 : f32 to vector<2x8x1xf32>
    %43 = arith.mulf %41, %42 : vector<2x8x1xf32>
    %44 = arith.mulf %38, %38 : vector<2x8x1xf32>
    %45 = arith.subf %43, %44 : vector<2x8x1xf32>
    %cst_20 = arith.constant 9.99999974E-6 : f32
    %46 = vector.broadcast %cst_20 : f32 to vector<2x8x1xf32>
    %47 = arith.addf %45, %46 : vector<2x8x1xf32>
    %48 = math.rsqrt %47 : vector<2x8x1xf32>
    %49 = vector.broadcast %38 : vector<2x8x1xf32> to vector<2x8x128xf32>
    %50 = arith.subf %34, %49 : vector<2x8x128xf32>
    %51 = vector.broadcast %48 : vector<2x8x1xf32> to vector<2x8x128xf32>
    %52 = arith.mulf %50, %51 : vector<2x8x128xf32>
    %53 = vector.broadcast %10 : vector<1x1x128xf32> to vector<2x8x128xf32>
    %54 = arith.mulf %52, %53 : vector<2x8x128xf32>
    %55 = vector.broadcast %12 : vector<1x1x128xf32> to vector<2x8x128xf32>
    %56 = arith.addf %54, %55 : vector<2x8x128xf32>
    %57 = vector.shape_cast %56 : vector<2x8x128xf32> to vector<16x128xf32>
    %58 = arith.truncf %57 : vector<16x128xf32> to vector<16x128xbf16>
    %c0_21 = arith.constant 0 : index
    %c0_22 = arith.constant 0 : index
    %59 = vector.load %arg6[%c0_21, %c0_22] : memref<128x128xbf16, #tpu.memory_space<vmem>>, vector<128x128xbf16>
    %cst_23 = arith.constant dense<0.000000e+00> : vector<16x128xf32>
    %60 = tpu.matmul %58, %59, %cst_23 {dimension_numbers = #tpu.dot_dimension_numbers<[1], [0], [0], [1], [0, 0, 1, 1], [], []>} : vector<16x128xbf16>, vector<128x128xbf16>, vector<16x128xf32> -> vector<16x128xf32>
    %c0_24 = arith.constant 0 : index
    %c0_25 = arith.constant 0 : index
    %61 = vector.load %arg7[%c0_24, %c0_25] : memref<1x128xf32, #tpu.memory_space<vmem>>, vector<1x128xf32>
    %62 = vector.broadcast %61 : vector<1x128xf32> to vector<16x128xf32>
    %63 = arith.addf %60, %62 : vector<16x128xf32>
    %cst_26 = arith.constant 0.000000e+00 : f32
    %64 = vector.broadcast %cst_26 : f32 to vector<16x128xf32>
    %65 = arith.maximumf %63, %64 : vector<16x128xf32>
    %66 = arith.truncf %65 : vector<16x128xf32> to vector<16x128xbf16>
    %c0_27 = arith.constant 0 : index
    %c0_28 = arith.constant 0 : index
    %67 = vector.load %arg8[%c0_27, %c0_28] : memref<128x128xbf16, #tpu.memory_space<vmem>>, vector<128x128xbf16>
    %cst_29 = arith.constant dense<0.000000e+00> : vector<16x128xf32>
    %68 = tpu.matmul %66, %67, %cst_29 {dimension_numbers = #tpu.dot_dimension_numbers<[1], [0], [0], [1], [0, 0, 1, 1], [], []>} : vector<16x128xbf16>, vector<128x128xbf16>, vector<16x128xf32> -> vector<16x128xf32>
    %69 = vector.broadcast %8 : vector<1x128xf32> to vector<16x128xf32>
    %70 = arith.addf %68, %69 : vector<16x128xf32>
    %71 = vector.shape_cast %70 : vector<16x128xf32> to vector<2x8x128xf32>
    %72 = arith.addf %71, %56 : vector<2x8x128xf32>
    %cst_30 = arith.constant dense<0.000000e+00> : vector<2x8xf32>
    %73 = vector.multi_reduction <add>, %72, %cst_30 [2] : vector<2x8x128xf32> to vector<2x8xf32>
    %74 = vector.shape_cast %73 : vector<2x8xf32> to vector<2x8x1xf32>
    %cst_31 = arith.constant 3.125000e-02 : f32
    %75 = vector.broadcast %cst_31 : f32 to vector<2x8x1xf32>
    %76 = arith.mulf %74, %75 : vector<2x8x1xf32>
    %77 = arith.mulf %72, %72 : vector<2x8x128xf32>
    %cst_32 = arith.constant dense<0.000000e+00> : vector<2x8xf32>
    %78 = vector.multi_reduction <add>, %77, %cst_32 [2] : vector<2x8x128xf32> to vector<2x8xf32>
    %79 = vector.shape_cast %78 : vector<2x8xf32> to vector<2x8x1xf32>
    %cst_33 = arith.constant 3.125000e-02 : f32
    %80 = vector.broadcast %cst_33 : f32 to vector<2x8x1xf32>
    %81 = arith.mulf %79, %80 : vector<2x8x1xf32>
    %82 = arith.mulf %76, %76 : vector<2x8x1xf32>
    %83 = arith.subf %81, %82 : vector<2x8x1xf32>
    %cst_34 = arith.constant 9.99999974E-6 : f32
    %84 = vector.broadcast %cst_34 : f32 to vector<2x8x1xf32>
    %85 = arith.addf %83, %84 : vector<2x8x1xf32>
    %86 = math.rsqrt %85 : vector<2x8x1xf32>
    %87 = vector.broadcast %76 : vector<2x8x1xf32> to vector<2x8x128xf32>
    %88 = arith.subf %72, %87 : vector<2x8x128xf32>
    %89 = vector.broadcast %86 : vector<2x8x1xf32> to vector<2x8x128xf32>
    %90 = arith.mulf %88, %89 : vector<2x8x128xf32>
    %91 = vector.broadcast %14 : vector<1x1x128xf32> to vector<2x8x128xf32>
    %92 = arith.mulf %90, %91 : vector<2x8x128xf32>
    %93 = vector.broadcast %16 : vector<1x1x128xf32> to vector<2x8x128xf32>
    %94 = arith.addf %92, %93 : vector<2x8x128xf32>
    %95 = arith.truncf %94 : vector<2x8x128xf32> to vector<2x8x128xbf16>
    %c0_35 = arith.constant 0 : index
    %c0_36 = arith.constant 0 : index
    %c0_37 = arith.constant 0 : index
    %96 = vector.load %arg10[%c0_35, %c0_36, %c0_37] : memref<2x8x128xbf16, #tpu.memory_space<vmem>>, vector<2x8x128xbf16>
    tpu.vector_store %arg10[%c0_35, %c0_36, %c0_37], %95 {strides = array<i32>} : memref<2x8x128xbf16, #tpu.memory_space<vmem>>, vector<2x8x128xbf16>,
    return
  }
  func.func @transform_0(%arg0: i32) -> (i32, i32, i32) {
    %c0_i32 = arith.constant 0 : i32
    %c0_i32_0 = arith.constant 0 : i32
    %c0_i32_1 = arith.constant 0 : i32
    return %arg0, %c0_i32, %c0_i32_0 : i32, i32, i32
  }
  func.func @transform_1(%arg0: i32) -> (i32, i32, i32) {
    %c0_i32 = arith.constant 0 : i32
    %c0_i32_0 = arith.constant 0 : i32
    %c0_i32_1 = arith.constant 0 : i32
    %c0_i32_2 = arith.constant 0 : i32
    return %c0_i32, %c0_i32_0, %c0_i32_1 : i32, i32, i32
  }
  func.func @transform_2(%arg0: i32) -> (i32, i32) {
    %c0_i32 = arith.constant 0 : i32
    %c0_i32_0 = arith.constant 0 : i32
    %c0_i32_1 = arith.constant 0 : i32
    return %c0_i32, %c0_i32_0 : i32, i32
  }
  func.func @transform_3(%arg0: i32) -> (i32, i32, i32) {
    %c0_i32 = arith.constant 0 : i32
    %c0_i32_0 = arith.constant 0 : i32
    %c0_i32_1 = arith.constant 0 : i32
    %c0_i32_2 = arith.constant 0 : i32
    return %c0_i32, %c0_i32_0, %c0_i32_1 : i32, i32, i32
  }
  func.func @transform_4(%arg0: i32) -> (i32, i32) {
    %c0_i32 = arith.constant 0 : i32
    %c0_i32_0 = arith.constant 0 : i32
    %c0_i32_1 = arith.constant 0 : i32
    return %c0_i32, %c0_i32_0 : i32, i32
  }
  func.func @transform_5(%arg0: i32) -> (i32, i32) {
    %c0_i32 = arith.constant 0 : i32
    %c0_i32_0 = arith.constant 0 : i32
    %c0_i32_1 = arith.constant 0 : i32
    return %c0_i32, %c0_i32_0 : i32, i32
  }
  func.func @transform_6(%arg0: i32) -> (i32, i32) {
    %c0_i32 = arith.constant 0 : i32
    %c0_i32_0 = arith.constant 0 : i32
    %c0_i32_1 = arith.constant 0 : i32
    return %c0_i32, %c0_i32_0 : i32, i32
  }
  func.func @transform_7(%arg0: i32) -> (i32, i32) {
    %c0_i32 = arith.constant 0 : i32
    %c0_i32_0 = arith.constant 0 : i32
    %c0_i32_1 = arith.constant 0 : i32
    return %c0_i32, %c0_i32_0 : i32, i32
  }
  func.func @transform_8(%arg0: i32) -> (i32, i32) {
    %c0_i32 = arith.constant 0 : i32
    %c0_i32_0 = arith.constant 0 : i32
    %c0_i32_1 = arith.constant 0 : i32
    return %c0_i32, %c0_i32_0 : i32, i32
  }
  func.func @transform_9(%arg0: i32) -> (i32, i32, i32) {
    %c0_i32 = arith.constant 0 : i32
    %c0_i32_0 = arith.constant 0 : i32
    %c0_i32_1 = arith.constant 0 : i32
    return %arg0, %c0_i32, %c0_i32_0 : i32, i32, i32
  }
}

</mosaic_0001>

<llo_original>
// kernel: tpu_custom_call.1
$region0: #{tpu_custom_call.1}
  #allocation0 [shape = 'u32[]', space=smem, size = 0x4, offset = 0x4, fixed_abs, tag = 'smem constant byte address 0x4 - core index']
  #allocation1 [shape = 'u32[144,128]{1,0:T(1,128)}', space=vmem, size = 0x12000, scoped, tag = 'internal scratch']
  %s0 = inlined_call_operand.vmem [shape: bf16[8,8,128], index: 0, kind: input, shape index: {}]
  %s1 = inlined_call_operand.vmem [shape: bf16[2,16,8], index: 1, kind: input, shape index: {}]
  %s2 = inlined_call_operand.vmem [shape: f32[16,1], index: 2, kind: input, shape index: {}]
  %s3 = inlined_call_operand.vmem [shape: bf16[2,8,16], index: 3, kind: input, shape index: {}]
  %s4 = inlined_call_operand.vmem [shape: f32[8,1], index: 4, kind: input, shape index: {}]
  %s5 = inlined_call_operand.hbm [shape: bf16[128,128], index: 5, kind: input, shape index: {}]
  %s6 = inlined_call_operand.vmem [shape: f32[1,128], index: 6, kind: input, shape index: {}]
  %s7 = inlined_call_operand.hbm [shape: bf16[128,128], index: 7, kind: input, shape index: {}]
  %s8 = inlined_call_operand.vmem [shape: f32[8,128], index: 8, kind: input, shape index: {}]
  %s9 = inlined_call_operand.hbm [shape: bf16[8,8,128], index: 9, kind: output, shape index: {}]
  %s10 = sld [smem:[#allocation0]]
  $region77: #{tpu_custom_call.1} parent=0
    _
  %s12 = ssub.s32 1, %s10
  %s13 = scalar_select 0, %s12, %s10
  $region1: #{tpu_custom_call.1} parent=0
    #allocation2 [shape = 'u8[32768]{0}', space=vmem, size = 0x8000, scoped, tag = 'input window, operand 5, single buffered']
    #allocation3 [shape = 's32[2]{0}', space=sflag, size = 0x8, scoped, tag = 'scoped memory for tpu_custom_call.1']
    #allocation4 [shape = 's32[2]{0}', space=sflag, size = 0x8, scoped, tag = 'scoped memory for tpu_custom_call.1']
    #allocation5 [shape = 'u8[32768]{0}', space=vmem, size = 0x8000, scoped, tag = 'input window, operand 7, single buffered']
    #allocation6 [shape = 's32[1]{0}', space=sflag, size = 0x4, scoped, tag = 'scoped memory for tpu_custom_call.1']
    #allocation7 [shape = 'u8[8192]{0}', space=vmem, size = 0x2000, scoped, tag = 'output window, operand 0']
    %14 = vsyncpa [#allocation3], 0
    %15 = vsyncpa [#allocation6], 0
    %16 = vsyncpa [#allocation4], 0
    %s17 = scalar_lea.sflag [#allocation4], 1
    %18 = vsyncpa %s17, 0
    loop: start=0, step=1, limit=6
    $region2: #{tpu_custom_call.1} parent=1 // loop_pre_header
      _
    $region3: #{tpu_custom_call.1} parent=1 // loop_header
      %s20 = sphi 0, %s24
      %p21 = scmp.ge.s32.totalorder %s20, 6
      %s30 = sphi 0, %s32
      %s33 = sphi 0, %s30
      %s34 = sphi 0, %s33
      %s50 = sphi 0, %s34
      %s54 = sphi 0, %s54
      %s56 = sphi 0, %s54
      %s57 = sphi 0, %s56
      %s71 = sphi 0, %s57
      %s75 = sphi 0, %s75
      %s77 = sphi 0, %s75
      %s78 = sphi 0, %s77
      %s92 = sphi 0, %s78
      %s96 = sphi 0, %s96
      %s98 = sphi 0, %s96
      %s99 = sphi 0, %s98
      %s113 = sphi 0, %s99
      %s117 = sphi 0, %s117
      %s119 = sphi 0, %s117
      %s120 = sphi 0, %s119
      %s134 = sphi 0, %s120
      %s138 = sphi 0, %s138
      %s140 = sphi 0, %s138
      %s141 = sphi 0, %s140
      %s155 = sphi 0, %s141
      %s159 = sphi 0, %s159
      %s161 = sphi 0, %s159
      %s162 = sphi 0, %s161
      %s176 = sphi 0, %s162
      %s180 = sphi 0, %s180
      %s182 = sphi 0, %s180
      %s183 = sphi 0, %s182
      %s197 = sphi 0, %s183
      %s201 = sphi 0, %s201
      %s203 = sphi 0, %s201
      %s204 = sphi 0, %s203
      %s218 = sphi 0, %s204
      %s224 = sphi 0, %s226
      %s227 = sphi 0, %s224
      %s228 = sphi 0, %s227
      %s244 = sphi 0, %s228
    $region4: #{tpu_custom_call.1} parent=1 // loop_header_branch
      %23 = sbr.rel (%p21) target = $region8
    $region5: #{tpu_custom_call.1} parent=1 // loop_body
      %s25 = ssub.s32 %s20, 1
      %s26 = ssub.s32 %s20, 2
      %s27 = sadd.s32 %s20, 1
      %s28 = ssub.s32 %s20, %s27
      %p29 = scmp.eq.s32.totalorder %s28, 0
      %s31 = sadd.s32 %s30, 1
      %s32 = scalar_select %p29, %s30, %s31
      %p35 = pneg %p29
      %p36 = scmp.eq.s32.totalorder %s20, 3
      %p37 = por %p35, %p36
      %p38 = scmp.ne.s32.totalorder %s30, %s33
      %p39 = scmp.eq.s32.totalorder %s20, 0
      %p40 = por %p38, %p39
      %p41 = scmp.ne.s32.totalorder %s30, %s33
      %p42 = scmp.eq.s32.totalorder %s25, 3
      %p43 = por %p41, %p42
      %p44 = scmp.ne.s32.totalorder %s33, %s34
      %p45 = scmp.eq.s32.totalorder %s25, 0
      %p46 = por %p44, %p45
      %p47 = scmp.ne.s32.totalorder %s33, %s34
      %p48 = scmp.eq.s32.totalorder %s26, 3
      %p49 = por %p47, %p48
      %p51 = scmp.ne.s32.totalorder %s34, %s50
      %p52 = scmp.eq.s32.totalorder %s26, 0
      %p53 = por %p51, %p52
      %s55 = sadd.s32 %s54, 1
      %p58 = scmp.eq.s32.totalorder %s20, 3
      %p59 = scmp.ne.s32.totalorder %s54, %s56
      %p60 = scmp.eq.s32.totalorder %s20, 0
      %p61 = por %p59, %p60
      %p62 = scmp.ne.s32.totalorder %s54, %s56
      %p63 = scmp.eq.s32.totalorder %s25, 3
      %p64 = por %p62, %p63
      %p65 = scmp.ne.s32.totalorder %s56, %s57
      %p66 = scmp.eq.s32.totalorder %s25, 0
      %p67 = por %p65, %p66
      %p68 = scmp.ne.s32.totalorder %s56, %s57
      %p69 = scmp.eq.s32.totalorder %s26, 3
      %p70 = por %p68, %p69
      %p72 = scmp.ne.s32.totalorder %s57, %s71
      %p73 = scmp.eq.s32.totalorder %s26, 0
      %p74 = por %p72, %p73
      %s76 = sadd.s32 %s75, 1
      %p79 = scmp.eq.s32.totalorder %s20, 3
      %p80 = scmp.ne.s32.totalorder %s75, %s77
      %p81 = scmp.eq.s32.totalorder %s20, 0
      %p82 = por %p80, %p81
      %p83 = scmp.ne.s32.totalorder %s75, %s77
      %p84 = scmp.eq.s32.totalorder %s25, 3
      %p85 = por %p83, %p84
      %p86 = scmp.ne.s32.totalorder %s77, %s78
      %p87 = scmp.eq.s32.totalorder %s25, 0
      %p88 = por %p86, %p87
      %p89 = scmp.ne.s32.totalorder %s77, %s78
      %p90 = scmp.eq.s32.totalorder %s26, 3
      %p91 = por %p89, %p90
      %p93 = scmp.ne.s32.totalorder %s78, %s92
      %p94 = scmp.eq.s32.totalorder %s26, 0
      %p95 = por %p93, %p94
      %s97 = sadd.s32 %s96, 1
      %p100 = scmp.eq.s32.totalorder %s20, 3
      %p101 = scmp.ne.s32.totalorder %s96, %s98
      %p102 = scmp.eq.s32.totalorder %s20, 0
      %p103 = por %p101, %p102
      %p104 = scmp.ne.s32.totalorder %s96, %s98
      %p105 = scmp.eq.s32.totalorder %s25, 3
      %p106 = por %p104, %p105
      %p107 = scmp.ne.s32.totalorder %s98, %s99
      %p108 = scmp.eq.s32.totalorder %s25, 0
      %p109 = por %p107, %p108
      %p110 = scmp.ne.s32.totalorder %s98, %s99
      %p111 = scmp.eq.s32.totalorder %s26, 3
      %p112 = por %p110, %p111
      %p114 = scmp.ne.s32.totalorder %s99, %s113
      %p115 = scmp.eq.s32.totalorder %s26, 0
      %p116 = por %p114, %p115
      %s118 = sadd.s32 %s117, 1
      %p121 = scmp.eq.s32.totalorder %s20, 3
      %p122 = scmp.ne.s32.totalorder %s117, %s119
      %p123 = scmp.eq.s32.totalorder %s20, 0
      %p124 = por %p122, %p123
      %p125 = scmp.ne.s32.totalorder %s117, %s119
      %p126 = scmp.eq.s32.totalorder %s25, 3
      %p127 = por %p125, %p126
      %p128 = scmp.ne.s32.totalorder %s119, %s120
      %p129 = scmp.eq.s32.totalorder %s25, 0
      %p130 = por %p128, %p129
      %p131 = scmp.ne.s32.totalorder %s119, %s120
      %p132 = scmp.eq.s32.totalorder %s26, 3
      %p133 = por %p131, %p132
      %p135 = scmp.ne.s32.totalorder %s120, %s134
      %p136 = scmp.eq.s32.totalorder %s26, 0
      %p137 = por %p135, %p136
      %s139 = sadd.s32 %s138, 1
      %p142 = scmp.eq.s32.totalorder %s20, 3
      %p143 = scmp.ne.s32.totalorder %s138, %s140
      %p144 = scmp.eq.s32.totalorder %s20, 0
      %p145 = por %p143, %p144
      %p146 = scmp.ne.s32.totalorder %s138, %s140
      %p147 = scmp.eq.s32.totalorder %s25, 3
      %p148 = por %p146, %p147
      %p149 = scmp.ne.s32.totalorder %s140, %s141
      %p150 = scmp.eq.s32.totalorder %s25, 0
      %p151 = por %p149, %p150
      %p152 = scmp.ne.s32.totalorder %s140, %s141
      %p153 = scmp.eq.s32.totalorder %s26, 3
      %p154 = por %p152, %p153
      %p156 = scmp.ne.s32.totalorder %s141, %s155
      %p157 = scmp.eq.s32.totalorder %s26, 0
      %p158 = por %p156, %p157
      %s160 = sadd.s32 %s159, 1
      %p163 = scmp.eq.s32.totalorder %s20, 3
      %p164 = scmp.ne.s32.totalorder %s159, %s161
      %p165 = scmp.eq.s32.totalorder %s20, 0
      %p166 = por %p164, %p165
      %p167 = scmp.ne.s32.totalorder %s159, %s161
      %p168 = scmp.eq.s32.totalorder %s25, 3
      %p169 = por %p167, %p168
      %p170 = scmp.ne.s32.totalorder %s161, %s162
      %p171 = scmp.eq.s32.totalorder %s25, 0
      %p172 = por %p170, %p171
      %p173 = scmp.ne.s32.totalorder %s161, %s162
      %p174 = scmp.eq.s32.totalorder %s26, 3
      %p175 = por %p173, %p174
      %p177 = scmp.ne.s32.totalorder %s162, %s176
      %p178 = scmp.eq.s32.totalorder %s26, 0
      %p179 = por %p177, %p178
      %s181 = sadd.s32 %s180, 1
      %p184 = scmp.eq.s32.totalorder %s20, 3
      %p185 = scmp.ne.s32.totalorder %s180, %s182
      %p186 = scmp.eq.s32.totalorder %s20, 0
      %p187 = por %p185, %p186
      %p188 = scmp.ne.s32.totalorder %s180, %s182
      %p189 = scmp.eq.s32.totalorder %s25, 3
      %p190 = por %p188, %p189
      %p191 = scmp.ne.s32.totalorder %s182, %s183
      %p192 = scmp.eq.s32.totalorder %s25, 0
      %p193 = por %p191, %p192
      %p194 = scmp.ne.s32.totalorder %s182, %s183
      %p195 = scmp.eq.s32.totalorder %s26, 3
      %p196 = por %p194, %p195
      %p198 = scmp.ne.s32.totalorder %s183, %s197
      %p199 = scmp.eq.s32.totalorder %s26, 0
      %p200 = por %p198, %p199
      %s202 = sadd.s32 %s201, 1
      %p205 = scmp.eq.s32.totalorder %s20, 3
      %p206 = scmp.ne.s32.totalorder %s201, %s203
      %p207 = scmp.eq.s32.totalorder %s20, 0
      %p208 = por %p206, %p207
      %p209 = scmp.ne.s32.totalorder %s201, %s203
      %p210 = scmp.eq.s32.totalorder %s25, 3
      %p211 = por %p209, %p210
      %p212 = scmp.ne.s32.totalorder %s203, %s204
      %p213 = scmp.eq.s32.totalorder %s25, 0
      %p214 = por %p212, %p213
      %p215 = scmp.ne.s32.totalorder %s203, %s204
      %p216 = scmp.eq.s32.totalorder %s26, 3
      %p217 = por %p215, %p216
      %p219 = scmp.ne.s32.totalorder %s204, %s218
      %p220 = scmp.eq.s32.totalorder %s26, 0
      %p221 = por %p219, %p220
      %s222 = ssub.s32 %s20, %s27
      %p223 = scmp.eq.s32.totalorder %s222, 0
      %s225 = sadd.s32 %s224, 1
      %s226 = scalar_select %p223, %s224, %s225
      %p229 = pneg %p223
      %p230 = scmp.eq.s32.totalorder %s20, 3
      %p231 = por %p229, %p230
      %p232 = scmp.ne.s32.totalorder %s224, %s227
      %p233 = scmp.eq.s32.totalorder %s20, 0
      %p234 = por %p232, %p233
      %p235 = scmp.ne.s32.totalorder %s224, %s227
      %p236 = scmp.eq.s32.totalorder %s25, 3
      %p237 = por %p235, %p236
      %p238 = scmp.ne.s32.totalorder %s227, %s228
      %p239 = scmp.eq.s32.totalorder %s25, 0
      %p240 = por %p238, %p239
      %p241 = scmp.ne.s32.totalorder %s227, %s228
      %p242 = scmp.eq.s32.totalorder %s26, 3
      %p243 = por %p241, %p242
      %p245 = scmp.ne.s32.totalorder %s228, %s244
      %p246 = scmp.eq.s32.totalorder %s26, 0
      %p247 = por %p245, %p246
      %p248 = scmp.le.s32.totalorder 1, %s20
      %p249 = scmp.lt.s32.totalorder %s20, 5
      %p250 = pnand %p248, %p249
      %p251 = pneg %p250
      // Predicated region
      $region9: #{tpu_custom_call.1} parent=5 // pred_check
        _
      $region10: #{tpu_custom_call.1} parent=5 // pred_check_branch
        %253 = sbr.rel (%p250) target = $region12
      $region11: #{tpu_custom_call.1} parent=5 // pred_region
        %s254 = ssub.s32 %s20, 1
        // Predicated region
        $region13: #{tpu_custom_call.1} parent=11 // pred_check
          %p255 = pneg %p67
        $region14: #{tpu_custom_call.1} parent=11 // pred_check_branch
          %257 = sbr.rel (%p255) target = $region16
        $region15: #{tpu_custom_call.1} parent=11 // pred_region
          _
        $region16: #{tpu_custom_call.1} parent=11 // pred_fallthru
          _
        // Predicated region
        $region17: #{tpu_custom_call.1} parent=11 // pred_check
          %p258 = pneg %p88
        $region18: #{tpu_custom_call.1} parent=11 // pred_check_branch
          %260 = sbr.rel (%p258) target = $region20
        $region19: #{tpu_custom_call.1} parent=11 // pred_region
          _
        $region20: #{tpu_custom_call.1} parent=11 // pred_fallthru
          _
        // Predicated region
        $region21: #{tpu_custom_call.1} parent=11 // pred_check
          %p261 = pneg %p109
        $region22: #{tpu_custom_call.1} parent=11 // pred_check_branch
          %263 = sbr.rel (%p261) target = $region24
        $region23: #{tpu_custom_call.1} parent=11 // pred_region
          _
        $region24: #{tpu_custom_call.1} parent=11 // pred_fallthru
          _
        // Predicated region
        $region25: #{tpu_custom_call.1} parent=11 // pred_check
          %p264 = pneg %p130
        $region26: #{tpu_custom_call.1} parent=11 // pred_check_branch
          %266 = sbr.rel (%p264) target = $region28
        $region27: #{tpu_custom_call.1} parent=11 // pred_region
          _
        $region28: #{tpu_custom_call.1} parent=11 // pred_fallthru
          _
        // Predicated region
        $region29: #{tpu_custom_call.1} parent=11 // pred_check
          %p267 = pneg %p151
        $region30: #{tpu_custom_call.1} parent=11 // pred_check_branch
          %269 = sbr.rel (%p267) target = $region32
        $region31: #{tpu_custom_call.1} parent=11 // pred_region
          %s271 = ssub.s32 1024, 1024
          %272 = vsyncadd [#allocation3], %s271
          %s273 = sshll.u32 [#allocation2], 4
          %s274 = int_to_ptr.vmem [resolvable:$true] %s273
          %279 = dma.hbm_to_vmem [thread:$0]  %s5, 1024, %s274, [#allocation3], 64, 64, 4
        $region32: #{tpu_custom_call.1} parent=11 // pred_fallthru
          _
        // Predicated region
        $region33: #{tpu_custom_call.1} parent=11 // pred_check
          %p280 = pneg %p172
        $region34: #{tpu_custom_call.1} parent=11 // pred_check_branch
          %282 = sbr.rel (%p280) target = $region36
        $region35: #{tpu_custom_call.1} parent=11 // pred_region
          _
        $region36: #{tpu_custom_call.1} parent=11 // pred_fallthru
          _
        // Predicated region
        $region37: #{tpu_custom_call.1} parent=11 // pred_check
          %p283 = pneg %p193
        $region38: #{tpu_custom_call.1} parent=11 // pred_check_branch
          %285 = sbr.rel (%p283) target = $region40
        $region39: #{tpu_custom_call.1} parent=11 // pred_region
          %s287 = ssub.s32 1024, 1024
          %288 = vsyncadd [#allocation6], %s287
          %s289 = sshll.u32 [#allocation5], 4
          %s290 = int_to_ptr.vmem [resolvable:$true] %s289
          %295 = dma.hbm_to_vmem [thread:$0]  %s7, 1024, %s290, [#allocation6], 64, 64, 4
        $region40: #{tpu_custom_call.1} parent=11 // pred_fallthru
          _
        // Predicated region
        $region41: #{tpu_custom_call.1} parent=11 // pred_check
          %p296 = pneg %p214
        $region42: #{tpu_custom_call.1} parent=11 // pred_check_branch
          %298 = sbr.rel (%p296) target = $region44
        $region43: #{tpu_custom_call.1} parent=11 // pred_region
          _
        $region44: #{tpu_custom_call.1} parent=11 // pred_fallthru
          _
      $region12: #{tpu_custom_call.1} parent=5 // pred_fallthru
        _
      %p299 = scmp.lt.s32.totalorder %s20, 4
      // Predicated region
      $region45: #{tpu_custom_call.1} parent=5 // pred_check
        %p300 = pneg %p299
      $region46: #{tpu_custom_call.1} parent=5 // pred_check_branch
        %302 = sbr.rel (%p300) target = $region48
      $region47: #{tpu_custom_call.1} parent=5 // pred_region
        // Predicated region
        $region49: #{tpu_custom_call.1} parent=47 // pred_check
          %p303 = pneg %p40
        $region50: #{tpu_custom_call.1} parent=47 // pred_check_branch
          %305 = sbr.rel (%p303) target = $region52
        $region51: #{tpu_custom_call.1} parent=47 // pred_region
          %s306 = smul.u32 2, %s20
          %p307 = scmp.lt.s32.totalorder %s306, 7
          %s308 = scalar_select %p307, %s306, 7
          %s309 = smul.addr %s308, 4
          %s310 = scalar_lea.vmem %s0, %s309
          %s311 = smul.u32 2, %s20
        $region52: #{tpu_custom_call.1} parent=47 // pred_fallthru
          _
      $region48: #{tpu_custom_call.1} parent=5 // pred_fallthru
        _
      %p312 = scmp.le.s32.totalorder 1, %s20
      %p313 = scmp.lt.s32.totalorder %s20, 5
      %p314 = pnand %p312, %p313
      %p315 = pneg %p314
      // Predicated region
      $region53: #{tpu_custom_call.1} parent=5 // pred_check
        _
      $region54: #{tpu_custom_call.1} parent=5 // pred_check_branch
        %317 = sbr.rel (%p314) target = $region56
      $region55: #{tpu_custom_call.1} parent=5 // pred_region
        %s318 = ssub.s32 %s20, 1
        // Predicated region
        $region57: #{tpu_custom_call.1} parent=55 // pred_check
          %p319 = pneg %p151
        $region58: #{tpu_custom_call.1} parent=55 // pred_check_branch
          %321 = sbr.rel (%p319) target = $region60
        $region59: #{tpu_custom_call.1} parent=55 // pred_region
          %322 = dma.done [#allocation3], 1024
        $region60: #{tpu_custom_call.1} parent=55 // pred_fallthru
          _
        // Predicated region
        $region61: #{tpu_custom_call.1} parent=55 // pred_check
          %p323 = pneg %p193
        $region62: #{tpu_custom_call.1} parent=55 // pred_check_branch
          %325 = sbr.rel (%p323) target = $region64
        $region63: #{tpu_custom_call.1} parent=55 // pred_region
          %326 = dma.done [#allocation6], 1024
        $region64: #{tpu_custom_call.1} parent=55 // pred_fallthru
          _
        %s327 = smul.u32 2, %s25
        %p328 = scmp.lt.s32.totalorder %s327, 7
        %s329 = scalar_select %p328, %s327, 7
        %s330 = smul.addr %s329, 4
        %s331 = scalar_lea.vmem %s0, %s330
        %p332 = pneg %p46
        %p333 = pneg %p43
        %p334 = pneg %p67
        %p335 = pneg %p64
        %p336 = pneg %p88
        %p337 = pneg %p85
        %p338 = pneg %p109
        %p339 = pneg %p106
        %p340 = pneg %p130
        %p341 = pneg %p127
        %p342 = pneg %p151
        %p343 = pneg %p148
        %p344 = pneg %p172
        %p345 = pneg %p169
        %p346 = pneg %p193
        %p347 = pneg %p190
        %p348 = pneg %p214
        %p349 = pneg %p211
        %p350 = pneg %p240
        %p351 = pneg %p237
        %s352 = sand.u32 %s227, 1
        %s353 = scalar_lea.sflag [#allocation4], %s352
        %s354 = sand.u32 %s227, 1
        %s355 = smul.addr %s354, 8
        %s356 = scalar_lea.vmem [#allocation7], %s355
        %s357 = smul.u32 2, %s25
        %p358 = scmp.lt.s32.totalorder %s357, 7
        %s359 = scalar_select %p358, %s357, 7
        %s360 = smul.addr %s359, 4
        %s361 = scalar_lea.vmem %s0, %s360
        %s362 = smul.u32 2, %s25
        %s363 = smul.u32 2, %s25
        %v365 = vld [vmem:[%s361] sm:$0xf]
        %v366 = vld [vmem:[%s361 + $0x4] sm:$0xf]
        %v367 = vunpack.c.l.bf16 %v365
        %v368 = vunpack.c.l.bf16 %v366
        %v369 = vlaneseq
        %v370 = vand.u32 %v369, 127
        %vm371 = vcmp.lt.s32.totalorder %v370, 32
        %v372 = vsel %vm371, 1, 0
        %v373 = vcvt.s32.f32 %v372
        %v374 = vld [vmem:[%s8] sm:$0xff]
        %v375 = vld [vmem:[%s1] sm:$0xf]
        %v376 = vld [vmem:[%s1 + $0x4] sm:$0xf]
        %v377 = vld [vmem:[%s1 + $0x8] sm:$0xf]
        %v378 = vld [vmem:[%s1 + $0xc] sm:$0xf]
        %v379 = vld [vmem:[%s2] sm:$0xff]
        %v380 = vld [vmem:[%s2 + $0x8] sm:$0xff]
        %382 = vset.pattern.permute.xlu0 0
        %383 = vperm.xlu0 %382, %v379
        %v384 = vpop.permute.xlu0 %383
        %387 = vset.pattern.permute.xlu0 0
        %388 = vperm.xlu0 %387, %v380
        %v389 = vpop.permute.xlu0 %388
        %v393 = vunpack.c.l.b16 %v375
        %v394 = vunpack.c.l.b16 %v376
        %v395 = vpack.c.b16 %v394, %v393
        %vm396 = vcmask 64512
        %v398 = vsel %vm396, %v395, 0
        %vm400 = vcmask 1043456
        %v402 = vsel %vm400, %v365, 0
        %404 = vmatprep.subr.bf16.mxu0 0
        %405 = vmatpush1.bf16.msra.mxu0 0
        %406 = vmatprep.subr.bf16.mxu0 0
        %407 = vmatpush1.bf16.msra.mxu0 0
        %408 = vmatprep.subr.bf16.mxu0 0
        %409 = vmatpush1.bf16.msra.mxu0 0
        %410 = vmatprep.subr.bf16.mxu0 0
        %411 = vmatpush1.bf16.msra.mxu0 0
        %412 = vmatprep.subr.bf16.mxu0 0
        %413 = vmatpush1.bf16.msra.mxu0 0
        %414 = vmatprep.subr.bf16.mxu0 0
        %415 = vmatpush1.bf16.msra.mxu0 0
        %416 = vmatprep.subr.bf16.mxu0 0
        %417 = vmatpush1.bf16.msra.mxu0 0
        %418 = vmatprep.subr.bf16.mxu0 0
        %419 = vmatpush1.bf16.msra.mxu0 %v402
        %420 = vmatprep.subr.bf16.mxu0 0
        %421 = vmatpush2.bf16.msra.mxu0 0
        %422 = vmatprep.subr.bf16.mxu0 0
        %423 = vmatpush2.bf16.msra.mxu0 0
        %424 = vmatprep.subr.bf16.mxu0 0
        %425 = vmatpush2.bf16.msra.mxu0 0
        %426 = vmatprep.subr.bf16.mxu0 0
        %427 = vmatpush2.bf16.msra.mxu0 0
        %428 = vmatprep.subr.bf16.mxu0 0
        %429 = vmatpush2.bf16.msra.mxu0 0
        %430 = vmatprep.subr.bf16.mxu0 0
        %431 = vmatpush2.bf16.msra.mxu0 0
        %432 = vmatprep.subr.bf16.mxu0 0
        %433 = vmatpush2.bf16.msra.mxu0 0
        %434 = vmatprep.subr.bf16.mxu0 0
        %435 = vmatpush2.bf16.msra.mxu0 0
        %436 = vmatprep.mubr.bf16.mxu0 0
        %437 = vmatmul.mubr.bf16.gmra.mxu0 %v398
        %v438 = vpop.f32.mrf.mxu0
        %v439 = vadd.f32 %v384, %v438
        %v440 = vpop.f32.mrf.mxu0
        %v441 = vpop.f32.mrf.mxu0
        %v442 = vadd.f32 %v389, %v441
        %v443 = vpop.f32.mrf.mxu0
        %444 = vdwg.mxu0
        %v447 = vunpack.c.l.b16 %v377
        %v448 = vunpack.c.l.b16 %v378
        %v449 = vpack.c.b16 %v448, %v447
        %v451 = vsel %vm396, %v449, 0
        %v454 = vsel %vm400, %v366, 0
        %456 = vmatprep.subr.bf16.mxu0 0
        %457 = vmatpush1.bf16.msra.mxu0 0
        %458 = vmatprep.subr.bf16.mxu0 0
        %459 = vmatpush1.bf16.msra.mxu0 0
        %460 = vmatprep.subr.bf16.mxu0 0
        %461 = vmatpush1.bf16.msra.mxu0 0
        %462 = vmatprep.subr.bf16.mxu0 0
        %463 = vmatpush1.bf16.msra.mxu0 0
        %464 = vmatprep.subr.bf16.mxu0 0
        %465 = vmatpush1.bf16.msra.mxu0 0
        %466 = vmatprep.subr.bf16.mxu0 0
        %467 = vmatpush1.bf16.msra.mxu0 0
        %468 = vmatprep.subr.bf16.mxu0 0
        %469 = vmatpush1.bf16.msra.mxu0 0
        %470 = vmatprep.subr.bf16.mxu0 0
        %471 = vmatpush1.bf16.msra.mxu0 %v454
        %472 = vmatprep.subr.bf16.mxu0 0
        %473 = vmatpush2.bf16.msra.mxu0 0
        %474 = vmatprep.subr.bf16.mxu0 0
        %475 = vmatpush2.bf16.msra.mxu0 0
        %476 = vmatprep.subr.bf16.mxu0 0
        %477 = vmatpush2.bf16.msra.mxu0 0
        %478 = vmatprep.subr.bf16.mxu0 0
        %479 = vmatpush2.bf16.msra.mxu0 0
        %480 = vmatprep.subr.bf16.mxu0 0
        %481 = vmatpush2.bf16.msra.mxu0 0
        %482 = vmatprep.subr.bf16.mxu0 0
        %483 = vmatpush2.bf16.msra.mxu0 0
        %484 = vmatprep.subr.bf16.mxu0 0
        %485 = vmatpush2.bf16.msra.mxu0 0
        %486 = vmatprep.subr.bf16.mxu0 0
        %487 = vmatpush2.bf16.msra.mxu0 0
        %488 = vmatprep.mubr.bf16.mxu0 0
        %489 = vmatmul.mubr.bf16.gmra.mxu0 %v451
        %v490 = vpop.f32.mrf.mxu0
        %v491 = vadd.f32 %v384, %v490
        %v492 = vpop.f32.mrf.mxu0
        %v493 = vpop.f32.mrf.mxu0
        %v494 = vadd.f32 %v389, %v493
        %v495 = vpop.f32.mrf.mxu0
        %496 = vdwg.mxu0
        %v497 = vmax.f32 %v439, 0.0
        %v498 = vmax.f32 %v442, 0.0
        %v499 = vmax.f32 %v491, 0.0
        %v500 = vmax.f32 %v494, 0.0
        %v501 = vld [vmem:[%s3] sm:$0xf]
        %v502 = vld [vmem:[%s3 + $0x4] sm:$0xf]
        %v503 = vpack.c.bf16 %v498, %v497
        %v504 = vpack.c.bf16 %v500, %v499
        %v505 = vld [vmem:[%s4] sm:$0xff]
        %507 = vset.pattern.permute.xlu0 0
        %508 = vperm.xlu0 %507, %v505
        %v509 = vpop.permute.xlu0 %508
        %vm511 = vcmask 130048
        %v513 = vsel %vm511, %v501, 0
        %515 = vmatprep.subr.bf16.mxu0 0
        %516 = vmatpush1.bf16.msra.mxu0 0
        %517 = vmatprep.subr.bf16.mxu0 0
        %518 = vmatpush1.bf16.msra.mxu0 0
        %519 = vmatprep.subr.bf16.mxu0 0
        %520 = vmatpush1.bf16.msra.mxu0 0
        %521 = vmatprep.subr.bf16.mxu0 0
        %522 = vmatpush1.bf16.msra.mxu0 0
        %523 = vmatprep.subr.bf16.mxu0 0
        %524 = vmatpush1.bf16.msra.mxu0 0
        %525 = vmatprep.subr.bf16.mxu0 0
        %526 = vmatpush1.bf16.msra.mxu0 0
        %527 = vmatprep.subr.bf16.mxu0 0
        %528 = vmatpush1.bf16.msra.mxu0 0
        %529 = vmatprep.subr.bf16.mxu0 0
        %530 = vmatpush1.bf16.msra.mxu0 %v503
        %531 = vmatprep.subr.bf16.mxu0 0
        %532 = vmatpush2.bf16.msra.mxu0 0
        %533 = vmatprep.subr.bf16.mxu0 0
        %534 = vmatpush2.bf16.msra.mxu0 0
        %535 = vmatprep.subr.bf16.mxu0 0
        %536 = vmatpush2.bf16.msra.mxu0 0
        %537 = vmatprep.subr.bf16.mxu0 0
        %538 = vmatpush2.bf16.msra.mxu0 0
        %539 = vmatprep.subr.bf16.mxu0 0
        %540 = vmatpush2.bf16.msra.mxu0 0
        %541 = vmatprep.subr.bf16.mxu0 0
        %542 = vmatpush2.bf16.msra.mxu0 0
        %543 = vmatprep.subr.bf16.mxu0 0
        %544 = vmatpush2.bf16.msra.mxu0 0
        %545 = vmatprep.subr.bf16.mxu0 0
        %546 = vmatpush2.bf16.msra.mxu0 0
        %547 = vmatprep.mubr.bf16.mxu0 0
        %548 = vmatmul.mubr.bf16.gmra.mxu0 %v513
        %v549 = vpop.f32.mrf.mxu0
        %v550 = vadd.f32 %v509, %v549
        %v551 = vpop.f32.mrf.mxu0
        %v552 = vpop.f32.mrf.mxu0
        %v553 = vpop.f32.mrf.mxu0
        %554 = vdwg.mxu0
        %v556 = vsel %vm511, %v502, 0
        %558 = vmatprep.subr.bf16.mxu0 0
        %559 = vmatpush1.bf16.msra.mxu0 0
        %560 = vmatprep.subr.bf16.mxu0 0
        %561 = vmatpush1.bf16.msra.mxu0 0
        %562 = vmatprep.subr.bf16.mxu0 0
        %563 = vmatpush1.bf16.msra.mxu0 0
        %564 = vmatprep.subr.bf16.mxu0 0
        %565 = vmatpush1.bf16.msra.mxu0 0
        %566 = vmatprep.subr.bf16.mxu0 0
        %567 = vmatpush1.bf16.msra.mxu0 0
        %568 = vmatprep.subr.bf16.mxu0 0
        %569 = vmatpush1.bf16.msra.mxu0 0
        %570 = vmatprep.subr.bf16.mxu0 0
        %571 = vmatpush1.bf16.msra.mxu0 0
        %572 = vmatprep.subr.bf16.mxu0 0
        %573 = vmatpush1.bf16.msra.mxu0 %v504
        %574 = vmatprep.subr.bf16.mxu0 0
        %575 = vmatpush2.bf16.msra.mxu0 0
        %576 = vmatprep.subr.bf16.mxu0 0
        %577 = vmatpush2.bf16.msra.mxu0 0
        %578 = vmatprep.subr.bf16.mxu0 0
        %579 = vmatpush2.bf16.msra.mxu0 0
        %580 = vmatprep.subr.bf16.mxu0 0
        %581 = vmatpush2.bf16.msra.mxu0 0
        %582 = vmatprep.subr.bf16.mxu0 0
        %583 = vmatpush2.bf16.msra.mxu0 0
        %584 = vmatprep.subr.bf16.mxu0 0
        %585 = vmatpush2.bf16.msra.mxu0 0
        %586 = vmatprep.subr.bf16.mxu0 0
        %587 = vmatpush2.bf16.msra.mxu0 0
        %588 = vmatprep.subr.bf16.mxu0 0
        %589 = vmatpush2.bf16.msra.mxu0 0
        %590 = vmatprep.mubr.bf16.mxu0 0
        %591 = vmatmul.mubr.bf16.gmra.mxu0 %v556
        %v592 = vpop.f32.mrf.mxu0
        %v593 = vadd.f32 %v509, %v592
        %v594 = vpop.f32.mrf.mxu0
        %v595 = vpop.f32.mrf.mxu0
        %v596 = vpop.f32.mrf.mxu0
        %597 = vdwg.mxu0
        %v598 = vadd.f32 %v550, %v367
        %v599 = vadd.f32 %v593, %v368
        %v600 = vmul.f32 %v598, %v373
        %v601 = vmul.f32 %v599, %v373
        %602 = vadd.xlane.f32.xlu0 %v600
        %v603 = vpop.xlane.xlu0 %602
        %604 = vadd.xlane.f32.xlu0 %v601
        %v605 = vpop.xlane.xlu0 %604
        %v606 = vmul.f32 %v603, 0.03125
        %v607 = vmul.f32 %v605, 0.03125
        %v608 = vmul.f32 %v600, %v600
        %v609 = vmul.f32 %v601, %v601
        %610 = vadd.xlane.f32.xlu0 %v608
        %v611 = vpop.xlane.xlu0 %610
        %612 = vadd.xlane.f32.xlu0 %v609
        %v613 = vpop.xlane.xlu0 %612
        %v614 = vmul.f32 %v611, 0.03125
        %v615 = vmul.f32 %v613, 0.03125
        %v616 = vmul.f32 %v606, %v606
        %v617 = vmul.f32 %v607, %v607
        %v618 = vsub.f32 %v614, %v616
        %v619 = vsub.f32 %v615, %v617
        %v620 = vadd.f32 %v618, 1e-05
        %v621 = vadd.f32 %v619, 1e-05
        %v622 = vrsqrt.pop %v620
        %v623 = vrsqrt.pop %v621
        %v624 = vsub.f32 %v600, %v606
        %v625 = vsub.f32 %v601, %v607
        %v626 = vmul.f32 %v624, %v622
        %v627 = vmul.f32 %v625, %v623
        %v628 = vlaneseq
        %v629 = vshrl.u32 %v628, 7
        %v630 = vsub.s32 1, %v629
        %v631 = vrot.slane %v374, %v630
        %v632 = vmul.f32 %v626, %v631
        %v633 = vmul.f32 %v627, %v631
        %v634 = vlaneseq
        %v635 = vshrl.u32 %v634, 7
        %v636 = vsub.s32 2, %v635
        %v637 = vrot.slane %v374, %v636
        %v638 = vadd.f32 %v632, %v637
        %v639 = vadd.f32 %v633, %v637
        %v640 = vpack.c.bf16 %v639, %v638
        %v641 = vld [vmem:[#allocation2] sm:$0xf]
        %v642 = vld [vmem:[#allocation2 + $0x4] sm:$0xf]
        %v643 = vld [vmem:[#allocation2 + $0x8] sm:$0xf]
        %v644 = vld [vmem:[#allocation2 + $0xc] sm:$0xf]
        %v645 = vld [vmem:[#allocation2 + $0x10] sm:$0xf]
        %v646 = vld [vmem:[#allocation2 + $0x14] sm:$0xf]
        %v647 = vld [vmem:[#allocation2 + $0x18] sm:$0xf]
        %v648 = vld [vmem:[#allocation2 + $0x1c] sm:$0xf]
        %v649 = vld [vmem:[#allocation2 + $0x20] sm:$0xf]
        %v650 = vld [vmem:[#allocation2 + $0x24] sm:$0xf]
        %v651 = vld [vmem:[#allocation2 + $0x28] sm:$0xf]
        %v652 = vld [vmem:[#allocation2 + $0x2c] sm:$0xf]
        %v653 = vld [vmem:[#allocation2 + $0x30] sm:$0xf]
        %v654 = vld [vmem:[#allocation2 + $0x34] sm:$0xf]
        %v655 = vld [vmem:[#allocation2 + $0x38] sm:$0xf]
        %v656 = vld [vmem:[#allocation2 + $0x3c] sm:$0xf]
        %v657 = vld [vmem:[%s6] sm:$0x1]
        %v659 = vlaneseq
        %v660 = vshrl.u32 %v659, 7
        %v661 = vsub.s32 0, %v660
        %v662 = vrot.slane %v657, %v661
        %v680 = vunpack.c.l.b16 %v641
        %v681 = vunpack.c.l.b16 %v642
        %v682 = vunpack.c.l.b16 %v643
        %v683 = vunpack.c.l.b16 %v644
        %v684 = vunpack.c.l.b16 %v645
        %v685 = vunpack.c.l.b16 %v646
        %v686 = vunpack.c.l.b16 %v647
        %v687 = vunpack.c.l.b16 %v648
        %v688 = vunpack.c.l.b16 %v649
        %v689 = vunpack.c.l.b16 %v650
        %v690 = vunpack.c.l.b16 %v651
        %v691 = vunpack.c.l.b16 %v652
        %v692 = vunpack.c.l.b16 %v653
        %v693 = vunpack.c.l.b16 %v654
        %v694 = vunpack.c.l.b16 %v655
        %v695 = vunpack.c.l.b16 %v656
        %v696 = vpack.c.b16 %v681, %v680
        %v697 = vpack.c.b16 %v683, %v682
        %v698 = vpack.c.b16 %v685, %v684
        %v699 = vpack.c.b16 %v687, %v686
        %v700 = vpack.c.b16 %v689, %v688
        %v701 = vpack.c.b16 %v691, %v690
        %v702 = vpack.c.b16 %v693, %v692
        %v703 = vpack.c.b16 %v695, %v694
        %712 = vmatprep.subr.bf16.mxu0 0
        %713 = vmatpush1.bf16.msra.mxu0 %v703
        %714 = vmatprep.subr.bf16.mxu0 0
        %715 = vmatpush1.bf16.msra.mxu0 %v702
        %716 = vmatprep.subr.bf16.mxu0 0
        %717 = vmatpush1.bf16.msra.mxu0 %v701
        %718 = vmatprep.subr.bf16.mxu0 0
        %719 = vmatpush1.bf16.msra.mxu0 %v700
        %720 = vmatprep.subr.bf16.mxu0 0
        %721 = vmatpush1.bf16.msra.mxu0 %v699
        %722 = vmatprep.subr.bf16.mxu0 0
        %723 = vmatpush1.bf16.msra.mxu0 %v698
        %724 = vmatprep.subr.bf16.mxu0 0
        %725 = vmatpush1.bf16.msra.mxu0 %v697
        %726 = vmatprep.subr.bf16.mxu0 0
        %727 = vmatpush1.bf16.msra.mxu0 %v696
        %728 = vmatprep.subr.bf16.mxu0 0
        %729 = vmatpush2.bf16.msra.mxu0 0
        %730 = vmatprep.subr.bf16.mxu0 0
        %731 = vmatpush2.bf16.msra.mxu0 0
        %732 = vmatprep.subr.bf16.mxu0 0
        %733 = vmatpush2.bf16.msra.mxu0 0
        %734 = vmatprep.subr.bf16.mxu0 0
        %735 = vmatpush2.bf16.msra.mxu0 0
        %736 = vmatprep.subr.bf16.mxu0 0
        %737 = vmatpush2.bf16.msra.mxu0 0
        %738 = vmatprep.subr.bf16.mxu0 0
        %739 = vmatpush2.bf16.msra.mxu0 0
        %740 = vmatprep.subr.bf16.mxu0 0
        %741 = vmatpush2.bf16.msra.mxu0 0
        %742 = vmatprep.subr.bf16.mxu0 0
        %743 = vmatpush2.bf16.msra.mxu0 0
        %744 = vmatprep.mubr.bf16.mxu0 0
        %745 = vmatmul.mubr.bf16.gmra.mxu0 %v640
        %v746 = vpop.f32.mrf.mxu0
        %v747 = vadd.f32 %v662, %v746
        %v748 = vpop.f32.mrf.mxu0
        %v749 = vpop.f32.mrf.mxu0
        %v750 = vadd.f32 %v662, %v749
        %v751 = vpop.f32.mrf.mxu0
        %752 = vdwg.mxu0
        %v753 = vmax.f32 %v747, 0.0
        %v754 = vmax.f32 %v750, 0.0
        %v755 = vpack.c.bf16 %v754, %v753
        %v756 = vld [vmem:[#allocation5] sm:$0xf]
        %v757 = vld [vmem:[#allocation5 + $0x4] sm:$0xf]
        %v758 = vld [vmem:[#allocation5 + $0x8] sm:$0xf]
        %v759 = vld [vmem:[#allocation5 + $0xc] sm:$0xf]
        %v760 = vld [vmem:[#allocation5 + $0x10] sm:$0xf]
        %v761 = vld [vmem:[#allocation5 + $0x14] sm:$0xf]
        %v762 = vld [vmem:[#allocation5 + $0x18] sm:$0xf]
        %v763 = vld [vmem:[#allocation5 + $0x1c] sm:$0xf]
        %v764 = vld [vmem:[#allocation5 + $0x20] sm:$0xf]
        %v765 = vld [vmem:[#allocation5 + $0x24] sm:$0xf]
        %v766 = vld [vmem:[#allocation5 + $0x28] sm:$0xf]
        %v767 = vld [vmem:[#allocation5 + $0x2c] sm:$0xf]
        %v768 = vld [vmem:[#allocation5 + $0x30] sm:$0xf]
        %v769 = vld [vmem:[#allocation5 + $0x34] sm:$0xf]
        %v770 = vld [vmem:[#allocation5 + $0x38] sm:$0xf]
        %v771 = vld [vmem:[#allocation5 + $0x3c] sm:$0xf]
        %v772 = vlaneseq
        %v773 = vshrl.u32 %v772, 7
        %v774 = vsub.s32 0, %v773
        %v775 = vrot.slane %v374, %v774
        %v792 = vunpack.c.l.b16 %v756
        %v793 = vunpack.c.l.b16 %v757
        %v794 = vunpack.c.l.b16 %v758
        %v795 = vunpack.c.l.b16 %v759
        %v796 = vunpack.c.l.b16 %v760
        %v797 = vunpack.c.l.b16 %v761
        %v798 = vunpack.c.l.b16 %v762
        %v799 = vunpack.c.l.b16 %v763
        %v800 = vunpack.c.l.b16 %v764
        %v801 = vunpack.c.l.b16 %v765
        %v802 = vunpack.c.l.b16 %v766
        %v803 = vunpack.c.l.b16 %v767
        %v804 = vunpack.c.l.b16 %v768
        %v805 = vunpack.c.l.b16 %v769
        %v806 = vunpack.c.l.b16 %v770
        %v807 = vunpack.c.l.b16 %v771
        %v808 = vpack.c.b16 %v793, %v792
        %v809 = vpack.c.b16 %v795, %v794
        %v810 = vpack.c.b16 %v797, %v796
        %v811 = vpack.c.b16 %v799, %v798
        %v812 = vpack.c.b16 %v801, %v800
        %v813 = vpack.c.b16 %v803, %v802
        %v814 = vpack.c.b16 %v805, %v804
        %v815 = vpack.c.b16 %v807, %v806
        %824 = vmatprep.subr.bf16.mxu0 0
        %825 = vmatpush1.bf16.msra.mxu0 %v815
        %826 = vmatprep.subr.bf16.mxu0 0
        %827 = vmatpush1.bf16.msra.mxu0 %v814
        %828 = vmatprep.subr.bf16.mxu0 0
        %829 = vmatpush1.bf16.msra.mxu0 %v813
        %830 = vmatprep.subr.bf16.mxu0 0
        %831 = vmatpush1.bf16.msra.mxu0 %v812
        %832 = vmatprep.subr.bf16.mxu0 0
        %833 = vmatpush1.bf16.msra.mxu0 %v811
        %834 = vmatprep.subr.bf16.mxu0 0
        %835 = vmatpush1.bf16.msra.mxu0 %v810
        %836 = vmatprep.subr.bf16.mxu0 0
        %837 = vmatpush1.bf16.msra.mxu0 %v809
        %838 = vmatprep.subr.bf16.mxu0 0
        %839 = vmatpush1.bf16.msra.mxu0 %v808
        %840 = vmatprep.subr.bf16.mxu0 0
        %841 = vmatpush2.bf16.msra.mxu0 0
        %842 = vmatprep.subr.bf16.mxu0 0
        %843 = vmatpush2.bf16.msra.mxu0 0
        %844 = vmatprep.subr.bf16.mxu0 0
        %845 = vmatpush2.bf16.msra.mxu0 0
        %846 = vmatprep.subr.bf16.mxu0 0
        %847 = vmatpush2.bf16.msra.mxu0 0
        %848 = vmatprep.subr.bf16.mxu0 0
        %849 = vmatpush2.bf16.msra.mxu0 0
        %850 = vmatprep.subr.bf16.mxu0 0
        %851 = vmatpush2.bf16.msra.mxu0 0
        %852 = vmatprep.subr.bf16.mxu0 0
        %853 = vmatpush2.bf16.msra.mxu0 0
        %854 = vmatprep.subr.bf16.mxu0 0
        %855 = vmatpush2.bf16.msra.mxu0 0
        %856 = vmatprep.mubr.bf16.mxu0 0
        %857 = vmatmul.mubr.bf16.gmra.mxu0 %v755
        %v858 = vpop.f32.mrf.mxu0
        %v859 = vadd.f32 %v775, %v858
        %v860 = vpop.f32.mrf.mxu0
        %v861 = vpop.f32.mrf.mxu0
        %v862 = vadd.f32 %v775, %v861
        %v863 = vpop.f32.mrf.mxu0
        %864 = vdwg.mxu0
        %v865 = vadd.f32 %v859, %v638
        %v866 = vadd.f32 %v862, %v639
        %867 = vadd.xlane.f32.xlu0 %v865
        %v868 = vpop.xlane.xlu0 %867
        %869 = vadd.xlane.f32.xlu0 %v866
        %v870 = vpop.xlane.xlu0 %869
        %v871 = vmul.f32 %v868, 0.03125
        %v872 = vmul.f32 %v870, 0.03125
        %v873 = vmul.f32 %v865, %v865
        %v874 = vmul.f32 %v866, %v866
        %875 = vadd.xlane.f32.xlu0 %v873
        %v876 = vpop.xlane.xlu0 %875
        %877 = vadd.xlane.f32.xlu0 %v874
        %v878 = vpop.xlane.xlu0 %877
        %v879 = vmul.f32 %v876, 0.03125
        %v880 = vmul.f32 %v878, 0.03125
        %v881 = vmul.f32 %v871, %v871
        %v882 = vmul.f32 %v872, %v872
        %v883 = vsub.f32 %v879, %v881
        %v884 = vsub.f32 %v880, %v882
        %v885 = vadd.f32 %v883, 1e-05
        %v886 = vadd.f32 %v884, 1e-05
        %v887 = vrsqrt.pop %v885
        %v888 = vrsqrt.pop %v886
        %v889 = vsub.f32 %v865, %v871
        %v890 = vsub.f32 %v866, %v872
        %v891 = vmul.f32 %v889, %v887
        %v892 = vmul.f32 %v890, %v888
        %v893 = vlaneseq
        %v894 = vshrl.u32 %v893, 7
        %v895 = vsub.s32 3, %v894
        %v896 = vrot.slane %v374, %v895
        %v897 = vmul.f32 %v891, %v896
        %v898 = vmul.f32 %v892, %v896
        %v899 = vlaneseq
        %v900 = vshrl.u32 %v899, 7
        %v901 = vsub.s32 4, %v900
        %v902 = vrot.slane %v374, %v901
        %v903 = vadd.f32 %v897, %v902
        %v904 = vadd.f32 %v898, %v902
        %v905 = vpack.c.bf16 %v903, %v903
        %v906 = vpack.c.bf16 %v904, %v904
        %907 = vst [vmem:[%s356] sm:$0xf] %v905
        %908 = vst [vmem:[%s356 + $0x4] sm:$0xf] %v906
        %s909 = sand.u32 %s227, 1
        %s910 = scalar_lea.sflag [#allocation4], %s909
        %s911 = sand.u32 %s227, 1
        %s912 = smul.addr %s911, 8
        %s913 = scalar_lea.vmem [#allocation7], %s912
        // Predicated region
        $region65: #{tpu_custom_call.1} parent=55 // pred_check
          %p914 = pneg %p237
        $region66: #{tpu_custom_call.1} parent=55 // pred_check_branch
          %916 = sbr.rel (%p914) target = $region68
        $region67: #{tpu_custom_call.1} parent=55 // pred_region
          %s917 = smul.u32 2, %s25
          %s919 = ssub.s32 128, 128
          %920 = vsyncadd %s910, %s919
          %s921 = smul.addr %s917, 64
          %s922 = scalar_lea.hbm %s9, %s921
          %s923 = sshll.u32 %s913, 4
          %s924 = int_to_ptr.vmem [resolvable:$true] %s923
          %929 = dma.vmem_to_hbm [thread:$0]  %s924, 128, %s922, %s910, 64, 64, 4
        $region68: #{tpu_custom_call.1} parent=55 // pred_fallthru
          _
      $region56: #{tpu_custom_call.1} parent=5 // pred_fallthru
        _
      %p930 = scmp.le.s32.totalorder 2, %s20
      // Predicated region
      $region69: #{tpu_custom_call.1} parent=5 // pred_check
        %p931 = pneg %p930
      $region70: #{tpu_custom_call.1} parent=5 // pred_check_branch
        %933 = sbr.rel (%p931) target = $region72
      $region71: #{tpu_custom_call.1} parent=5 // pred_region
        %s934 = ssub.s32 %s20, 2
        // Predicated region
        $region73: #{tpu_custom_call.1} parent=71 // pred_check
          %p935 = pneg %p243
        $region74: #{tpu_custom_call.1} parent=71 // pred_check_branch
          %937 = sbr.rel (%p935) target = $region76
        $region75: #{tpu_custom_call.1} parent=71 // pred_region
          %s938 = sand.u32 %s228, 1
          %s939 = scalar_lea.sflag [#allocation4], %s938
          %s940 = sand.u32 %s228, 1
          %s941 = smul.addr %s940, 8
          %s942 = scalar_lea.vmem [#allocation7], %s941
          %943 = dma.done %s939, 128
        $region76: #{tpu_custom_call.1} parent=71 // pred_fallthru
          _
      $region72: #{tpu_custom_call.1} parent=5 // pred_fallthru
        _
    $region6: #{tpu_custom_call.1} parent=1 // loop_footer
      %s24 = sadd.s32 1, %s20
    $region7: #{tpu_custom_call.1} parent=1 // loop_footer_branch
      %19 = sbr.rel target = $region3
    $region8: #{tpu_custom_call.1} parent=1 // loop_exit
      _
    %944 = vsyncpa [#allocation3], 1
    %s945 = scalar_lea.sflag [#allocation3], 1
    %946 = vsyncpa %s945, 1
    %947 = vsyncpa [#allocation6], 1
    %948 = vsyncpa [#allocation4], 1
    %s949 = scalar_lea.sflag [#allocation4], 1
    %950 = vsyncpa %s949, 1

// kernel: tpu_custom_call.1
$region0: #{tpu_custom_call.1}
  #allocation0 [shape = 'u32[]', space=smem, size = 0x4, offset = 0x4, fixed_abs, tag = 'smem constant byte address 0x4 - core index']
  #allocation1 [shape = 'u32[144,128]{1,0:T(1,128)}', space=vmem, size = 0x12000, scoped, tag = 'internal scratch']
  %s0 = inlined_call_operand.vmem [shape: bf16[8,8,128], index: 0, kind: input, shape index: {}]
  %s1 = inlined_call_operand.vmem [shape: bf16[2,16,8], index: 1, kind: input, shape index: {}]
  %s2 = inlined_call_operand.vmem [shape: f32[16,1], index: 2, kind: input, shape index: {}]
  %s3 = inlined_call_operand.vmem [shape: bf16[2,8,16], index: 3, kind: input, shape index: {}]
  %s4 = inlined_call_operand.vmem [shape: f32[8,1], index: 4, kind: input, shape index: {}]
  %s5 = inlined_call_operand.hbm [shape: bf16[128,128], index: 5, kind: input, shape index: {}]
  %s6 = inlined_call_operand.vmem [shape: f32[1,128], index: 6, kind: input, shape index: {}]
  %s7 = inlined_call_operand.hbm [shape: bf16[128,128], index: 7, kind: input, shape index: {}]
  %s8 = inlined_call_operand.vmem [shape: f32[8,128], index: 8, kind: input, shape index: {}]
  %s9 = inlined_call_operand.hbm [shape: bf16[8,8,128], index: 9, kind: output, shape index: {}]
  %s10 = sld [smem:[#allocation0]]
  $region77: #{tpu_custom_call.1} parent=0
    _
  %s12 = ssub.s32 1, %s10
  %s13 = scalar_select 0, %s12, %s10
  $region1: #{tpu_custom_call.1} parent=0
    #allocation2 [shape = 'u8[32768]{0}', space=vmem, size = 0x8000, scoped, tag = 'input window, operand 5, single buffered']
    #allocation3 [shape = 's32[2]{0}', space=sflag, size = 0x8, scoped, tag = 'scoped memory for tpu_custom_call.1']
    #allocation4 [shape = 's32[2]{0}', space=sflag, size = 0x8, scoped, tag = 'scoped memory for tpu_custom_call.1']
    #allocation5 [shape = 'u8[32768]{0}', space=vmem, size = 0x8000, scoped, tag = 'input window, operand 7, single buffered']
    #allocation6 [shape = 's32[1]{0}', space=sflag, size = 0x4, scoped, tag = 'scoped memory for tpu_custom_call.1']
    #allocation7 [shape = 'u8[8192]{0}', space=vmem, size = 0x2000, scoped, tag = 'output window, operand 0']
    %14 = vsyncpa [#allocation3], 0
    %15 = vsyncpa [#allocation6], 0
    %16 = vsyncpa [#allocation4], 0
    %s17 = scalar_lea.sflag [#allocation4], 1
    %18 = vsyncpa %s17, 0
    loop: start=0, step=1, limit=6
    $region2: #{tpu_custom_call.1} parent=1 // loop_pre_header
      _
    $region3: #{tpu_custom_call.1} parent=1 // loop_header
      %s20 = sphi 0, %s24
      %p21 = scmp.ge.s32.totalorder %s20, 6
      %s30 = sphi 0, %s32
      %s33 = sphi 0, %s30
      %s34 = sphi 0, %s33
      %s50 = sphi 0, %s34
      %s54 = sphi 0, %s54
      %s56 = sphi 0, %s54
      %s57 = sphi 0, %s56
      %s71 = sphi 0, %s57
      %s75 = sphi 0, %s75
      %s77 = sphi 0, %s75
      %s78 = sphi 0, %s77
      %s92 = sphi 0, %s78
      %s96 = sphi 0, %s96
      %s98 = sphi 0, %s96
      %s99 = sphi 0, %s98
      %s113 = sphi 0, %s99
      %s117 = sphi 0, %s117
      %s119 = sphi 0, %s117
      %s120 = sphi 0, %s119
      %s134 = sphi 0, %s120
      %s138 = sphi 0, %s138
      %s140 = sphi 0, %s138
      %s141 = sphi 0, %s140
      %s155 = sphi 0, %s141
      %s159 = sphi 0, %s159
      %s161 = sphi 0, %s159
      %s162 = sphi 0, %s161
      %s176 = sphi 0, %s162
      %s180 = sphi 0, %s180
      %s182 = sphi 0, %s180
      %s183 = sphi 0, %s182
      %s197 = sphi 0, %s183
      %s201 = sphi 0, %s201
      %s203 = sphi 0, %s201
      %s204 = sphi 0, %s203
      %s218 = sphi 0, %s204
      %s224 = sphi 0, %s226
      %s227 = sphi 0, %s224
      %s228 = sphi 0, %s227
      %s244 = sphi 0, %s228
    $region4: #{tpu_custom_call.1} parent=1 // loop_header_branch
      %23 = sbr.rel (%p21) target = $region8
    $region5: #{tpu_custom_call.1} parent=1 // loop_body
      %s25 = ssub.s32 %s20, 1
      %s26 = ssub.s32 %s20, 2
      %s27 = sadd.s32 %s20, 1
      %s28 = ssub.s32 %s20, %s27
      %p29 = scmp.eq.s32.totalorder %s28, 0
      %s31 = sadd.s32 %s30, 1
      %s32 = scalar_select %p29, %s30, %s31
      %p35 = pneg %p29
      %p36 = scmp.eq.s32.totalorder %s20, 3
      %p37 = por %p35, %p36
      %p38 = scmp.ne.s32.totalorder %s30, %s33
      %p39 = scmp.eq.s32.totalorder %s20, 0
      %p40 = por %p38, %p39
      %p41 = scmp.ne.s32.totalorder %s30, %s33
      %p42 = scmp.eq.s32.totalorder %s25, 3
      %p43 = por %p41, %p42
      %p44 = scmp.ne.s32.totalorder %s33, %s34
      %p45 = scmp.eq.s32.totalorder %s25, 0
      %p46 = por %p44, %p45
      %p47 = scmp.ne.s32.totalorder %s33, %s34
      %p48 = scmp.eq.s32.totalorder %s26, 3
      %p49 = por %p47, %p48
      %p51 = scmp.ne.s32.totalorder %s34, %s50
      %p52 = scmp.eq.s32.totalorder %s26, 0
      %p53 = por %p51, %p52
      %s55 = sadd.s32 %s54, 1
      %p58 = scmp.eq.s32.totalorder %s20, 3
      %p59 = scmp.ne.s32.totalorder %s54, %s56
      %p60 = scmp.eq.s32.totalorder %s20, 0
      %p61 = por %p59, %p60
      %p62 = scmp.ne.s32.totalorder %s54, %s56
      %p63 = scmp.eq.s32.totalorder %s25, 3
      %p64 = por %p62, %p63
      %p65 = scmp.ne.s32.totalorder %s56, %s57
      %p66 = scmp.eq.s32.totalorder %s25, 0
      %p67 = por %p65, %p66
      %p68 = scmp.ne.s32.totalorder %s56, %s57
      %p69 = scmp.eq.s32.totalorder %s26, 3
      %p70 = por %p68, %p69
      %p72 = scmp.ne.s32.totalorder %s57, %s71
      %p73 = scmp.eq.s32.totalorder %s26, 0
      %p74 = por %p72, %p73
      %s76 = sadd.s32 %s75, 1
      %p79 = scmp.eq.s32.totalorder %s20, 3
      %p80 = scmp.ne.s32.totalorder %s75, %s77
      %p81 = scmp.eq.s32.totalorder %s20, 0
      %p82 = por %p80, %p81
      %p83 = scmp.ne.s32.totalorder %s75, %s77
      %p84 = scmp.eq.s32.totalorder %s25, 3
      %p85 = por %p83, %p84
      %p86 = scmp.ne.s32.totalorder %s77, %s78
      %p87 = scmp.eq.s32.totalorder %s25, 0
      %p88 = por %p86, %p87
      %p89 = scmp.ne.s32.totalorder %s77, %s78
      %p90 = scmp.eq.s32.totalorder %s26, 3
      %p91 = por %p89, %p90
      %p93 = scmp.ne.s32.totalorder %s78, %s92
      %p94 = scmp.eq.s32.totalorder %s26, 0
      %p95 = por %p93, %p94
      %s97 = sadd.s32 %s96, 1
      %p100 = scmp.eq.s32.totalorder %s20, 3
      %p101 = scmp.ne.s32.totalorder %s96, %s98
      %p102 = scmp.eq.s32.totalorder %s20, 0
      %p103 = por %p101, %p102
      %p104 = scmp.ne.s32.totalorder %s96, %s98
      %p105 = scmp.eq.s32.totalorder %s25, 3
      %p106 = por %p104, %p105
      %p107 = scmp.ne.s32.totalorder %s98, %s99
      %p108 = scmp.eq.s32.totalorder %s25, 0
      %p109 = por %p107, %p108
      %p110 = scmp.ne.s32.totalorder %s98, %s99
      %p111 = scmp.eq.s32.totalorder %s26, 3
      %p112 = por %p110, %p111
      %p114 = scmp.ne.s32.totalorder %s99, %s113
      %p115 = scmp.eq.s32.totalorder %s26, 0
      %p116 = por %p114, %p115
      %s118 = sadd.s32 %s117, 1
      %p121 = scmp.eq.s32.totalorder %s20, 3
      %p122 = scmp.ne.s32.totalorder %s117, %s119
      %p123 = scmp.eq.s32.totalorder %s20, 0
      %p124 = por %p122, %p123
      %p125 = scmp.ne.s32.totalorder %s117, %s119
      %p126 = scmp.eq.s32.totalorder %s25, 3
      %p127 = por %p125, %p126
      %p128 = scmp.ne.s32.totalorder %s119, %s120
      %p129 = scmp.eq.s32.totalorder %s25, 0
      %p130 = por %p128, %p129
      %p131 = scmp.ne.s32.totalorder %s119, %s120
      %p132 = scmp.eq.s32.totalorder %s26, 3
      %p133 = por %p131, %p132
      %p135 = scmp.ne.s32.totalorder %s120, %s134
      %p136 = scmp.eq.s32.totalorder %s26, 0
      %p137 = por %p135, %p136
      %s139 = sadd.s32 %s138, 1
      %p142 = scmp.eq.s32.totalorder %s20, 3
      %p143 = scmp.ne.s32.totalorder %s138, %s140
      %p144 = scmp.eq.s32.totalorder %s20, 0
      %p145 = por %p143, %p144
      %p146 = scmp.ne.s32.totalorder %s138, %s140
      %p147 = scmp.eq.s32.totalorder %s25, 3
      %p148 = por %p146, %p147
      %p149 = scmp.ne.s32.totalorder %s140, %s141
      %p150 = scmp.eq.s32.totalorder %s25, 0
      %p151 = por %p149, %p150
      %p152 = scmp.ne.s32.totalorder %s140, %s141
      %p153 = scmp.eq.s32.totalorder %s26, 3
      %p154 = por %p152, %p153
      %p156 = scmp.ne.s32.totalorder %s141, %s155
      %p157 = scmp.eq.s32.totalorder %s26, 0
      %p158 = por %p156, %p157
      %s160 = sadd.s32 %s159, 1
      %p163 = scmp.eq.s32.totalorder %s20, 3
      %p164 = scmp.ne.s32.totalorder %s159, %s161
      %p165 = scmp.eq.s32.totalorder %s20, 0
      %p166 = por %p164, %p165
      %p167 = scmp.ne.s32.totalorder %s159, %s161
      %p168 = scmp.eq.s32.totalorder %s25, 3
      %p169 = por %p167, %p168
      %p170 = scmp.ne.s32.totalorder %s161, %s162
      %p171 = scmp.eq.s32.totalorder %s25, 0
      %p172 = por %p170, %p171
      %p173 = scmp.ne.s32.totalorder %s161, %s162
      %p174 = scmp.eq.s32.totalorder %s26, 3
      %p175 = por %p173, %p174
      %p177 = scmp.ne.s32.totalorder %s162, %s176
      %p178 = scmp.eq.s32.totalorder %s26, 0
      %p179 = por %p177, %p178
      %s181 = sadd.s32 %s180, 1
      %p184 = scmp.eq.s32.totalorder %s20, 3
      %p185 = scmp.ne.s32.totalorder %s180, %s182
      %p186 = scmp.eq.s32.totalorder %s20, 0
      %p187 = por %p185, %p186
      %p188 = scmp.ne.s32.totalorder %s180, %s182
      %p189 = scmp.eq.s32.totalorder %s25, 3
      %p190 = por %p188, %p189
      %p191 = scmp.ne.s32.totalorder %s182, %s183
      %p192 = scmp.eq.s32.totalorder %s25, 0
      %p193 = por %p191, %p192
      %p194 = scmp.ne.s32.totalorder %s182, %s183
      %p195 = scmp.eq.s32.totalorder %s26, 3
      %p196 = por %p194, %p195
      %p198 = scmp.ne.s32.totalorder %s183, %s197
      %p199 = scmp.eq.s32.totalorder %s26, 0
      %p200 = por %p198, %p199
      %s202 = sadd.s32 %s201, 1
      %p205 = scmp.eq.s32.totalorder %s20, 3
      %p206 = scmp.ne.s32.totalorder %s201, %s203
      %p207 = scmp.eq.s32.totalorder %s20, 0
      %p208 = por %p206, %p207
      %p209 = scmp.ne.s32.totalorder %s201, %s203
      %p210 = scmp.eq.s32.totalorder %s25, 3
      %p211 = por %p209, %p210
      %p212 = scmp.ne.s32.totalorder %s203, %s204
      %p213 = scmp.eq.s32.totalorder %s25, 0
      %p214 = por %p212, %p213
      %p215 = scmp.ne.s32.totalorder %s203, %s204
      %p216 = scmp.eq.s32.totalorder %s26, 3
      %p217 = por %p215, %p216
      %p219 = scmp.ne.s32.totalorder %s204, %s218
      %p220 = scmp.eq.s32.totalorder %s26, 0
      %p221 = por %p219, %p220
      %s222 = ssub.s32 %s20, %s27
      %p223 = scmp.eq.s32.totalorder %s222, 0
      %s225 = sadd.s32 %s224, 1
      %s226 = scalar_select %p223, %s224, %s225
      %p229 = pneg %p223
      %p230 = scmp.eq.s32.totalorder %s20, 3
      %p231 = por %p229, %p230
      %p232 = scmp.ne.s32.totalorder %s224, %s227
      %p233 = scmp.eq.s32.totalorder %s20, 0
      %p234 = por %p232, %p233
      %p235 = scmp.ne.s32.totalorder %s224, %s227
      %p236 = scmp.eq.s32.totalorder %s25, 3
      %p237 = por %p235, %p236
      %p238 = scmp.ne.s32.totalorder %s227, %s228
      %p239 = scmp.eq.s32.totalorder %s25, 0
      %p240 = por %p238, %p239
      %p241 = scmp.ne.s32.totalorder %s227, %s228
      %p242 = scmp.eq.s32.totalorder %s26, 3
      %p243 = por %p241, %p242
      %p245 = scmp.ne.s32.totalorder %s228, %s244
      %p246 = scmp.eq.s32.totalorder %s26, 0
      %p247 = por %p245, %p246
      %p248 = scmp.le.s32.totalorder 1, %s20
      %p249 = scmp.lt.s32.totalorder %s20, 5
      %p250 = pnand %p248, %p249
      %p251 = pneg %p250
      // Predicated region
      $region9: #{tpu_custom_call.1} parent=5 // pred_check
        _
      $region10: #{tpu_custom_call.1} parent=5 // pred_check_branch
        %253 = sbr.rel (%p250) target = $region12
      $region11: #{tpu_custom_call.1} parent=5 // pred_region
        %s254 = ssub.s32 %s20, 1
        // Predicated region
        $region13: #{tpu_custom_call.1} parent=11 // pred_check
          %p255 = pneg %p67
        $region14: #{tpu_custom_call.1} parent=11 // pred_check_branch
          %257 = sbr.rel (%p255) target = $region16
        $region15: #{tpu_custom_call.1} parent=11 // pred_region
          _
        $region16: #{tpu_custom_call.1} parent=11 // pred_fallthru
          _
        // Predicated region
        $region17: #{tpu_custom_call.1} parent=11 // pred_check
          %p258 = pneg %p88
        $region18: #{tpu_custom_call.1} parent=11 // pred_check_branch
          %260 = sbr.rel (%p258) target = $region20
        $region19: #{tpu_custom_call.1} parent=11 // pred_region
          _
        $region20: #{tpu_custom_call.1} parent=11 // pred_fallthru
          _
        // Predicated region
        $region21: #{tpu_custom_call.1} parent=11 // pred_check
          %p261 = pneg %p109
        $region22: #{tpu_custom_call.1} parent=11 // pred_check_branch
          %263 = sbr.rel (%p261) target = $region24
        $region23: #{tpu_custom_call.1} parent=11 // pred_region
          _
        $region24: #{tpu_custom_call.1} parent=11 // pred_fallthru
          _
        // Predicated region
        $region25: #{tpu_custom_call.1} parent=11 // pred_check
          %p264 = pneg %p130
        $region26: #{tpu_custom_call.1} parent=11 // pred_check_branch
          %266 = sbr.rel (%p264) target = $region28
        $region27: #{tpu_custom_call.1} parent=11 // pred_region
          _
        $region28: #{tpu_custom_call.1} parent=11 // pred_fallthru
          _
        // Predicated region
        $region29: #{tpu_custom_call.1} parent=11 // pred_check
          %p267 = pneg %p151
        $region30: #{tpu_custom_call.1} parent=11 // pred_check_branch
          %269 = sbr.rel (%p267) target = $region32
        $region31: #{tpu_custom_call.1} parent=11 // pred_region
          %s271 = ssub.s32 1024, 1024
          %272 = vsyncadd [#allocation3], %s271
          %s273 = sshll.u32 [#allocation2], 4
          %s274 = int_to_ptr.vmem [resolvable:$true] %s273
          %279 = dma.hbm_to_vmem [thread:$0]  %s5, 1024, %s274, [#allocation3], 64, 64, 4
        $region32: #{tpu_custom_call.1} parent=11 // pred_fallthru
          _
        // Predicated region
        $region33: #{tpu_custom_call.1} parent=11 // pred_check
          %p280 = pneg %p172
        $region34: #{tpu_custom_call.1} parent=11 // pred_check_branch
          %282 = sbr.rel (%p280) target = $region36
        $region35: #{tpu_custom_call.1} parent=11 // pred_region
          _
        $region36: #{tpu_custom_call.1} parent=11 // pred_fallthru
          _
        // Predicated region
        $region37: #{tpu_custom_call.1} parent=11 // pred_check
          %p283 = pneg %p193
        $region38: #{tpu_custom_call.1} parent=11 // pred_check_branch
          %285 = sbr.rel (%p283) target = $region40
        $region39: #{tpu_custom_call.1} parent=11 // pred_region
          %s287 = ssub.s32 1024, 1024
          %288 = vsyncadd [#allocation6], %s287
          %s289 = sshll.u32 [#allocation5], 4
          %s290 = int_to_ptr.vmem [resolvable:$true] %s289
          %295 = dma.hbm_to_vmem [thread:$0]  %s7, 1024, %s290, [#allocation6], 64, 64, 4
        $region40: #{tpu_custom_call.1} parent=11 // pred_fallthru
          _
        // Predicated region
        $region41: #{tpu_custom_call.1} parent=11 // pred_check
          %p296 = pneg %p214
        $region42: #{tpu_custom_call.1} parent=11 // pred_check_branch
          %298 = sbr.rel (%p296) target = $region44
        $region43: #{tpu_custom_call.1} parent=11 // pred_region
          _
        $region44: #{tpu_custom_call.1} parent=11 // pred_fallthru
          _
      $region12: #{tpu_custom_call.1} parent=5 // pred_fallthru
        _
      %p299 = scmp.lt.s32.totalorder %s20, 4
      // Predicated region
      $region45: #{tpu_custom_call.1} parent=5 // pred_check
        %p300 = pneg %p299
      $region46: #{tpu_custom_call.1} parent=5 // pred_check_branch
        %302 = sbr.rel (%p300) target = $region48
      $region47: #{tpu_custom_call.1} parent=5 // pred_region
        // Predicated region
        $region49: #{tpu_custom_call.1} parent=47 // pred_check
          %p303 = pneg %p40
        $region50: #{tpu_custom_call.1} parent=47 // pred_check_branch
          %305 = sbr.rel (%p303) target = $region52
        $region51: #{tpu_custom_call.1} parent=47 // pred_region
          %s306 = smul.u32 2, %s20
          %p307 = scmp.lt.s32.totalorder %s306, 7
          %s308 = scalar_select %p307, %s306, 7
          %s309 = smul.addr %s308, 4
          %s310 = scalar_lea.vmem %s0, %s309
          %s311 = smul.u32 2, %s20
        $region52: #{tpu_custom_call.1} parent=47 // pred_fallthru
          _
      $region48: #{tpu_custom_call.1} parent=5 // pred_fallthru
        _
      %p312 = scmp.le.s32.totalorder 1, %s20
      %p313 = scmp.lt.s32.totalorder %s20, 5
      %p314 = pnand %p312, %p313
      %p315 = pneg %p314
      // Predicated region
      $region53: #{tpu_custom_call.1} parent=5 // pred_check
        _
      $region54: #{tpu_custom_call.1} parent=5 // pred_check_branch
        %317 = sbr.rel (%p314) target = $region56
      $region55: #{tpu_custom_call.1} parent=5 // pred_region
        %s318 = ssub.s32 %s20, 1
        // Predicated region
        $region57: #{tpu_custom_call.1} parent=55 // pred_check
          %p319 = pneg %p151
        $region58: #{tpu_custom_call.1} parent=55 // pred_check_branch
          %321 = sbr.rel (%p319) target = $region60
        $region59: #{tpu_custom_call.1} parent=55 // pred_region
          %322 = dma.done [#allocation3], 1024
        $region60: #{tpu_custom_call.1} parent=55 // pred_fallthru
          _
        // Predicated region
        $region61: #{tpu_custom_call.1} parent=55 // pred_check
          %p323 = pneg %p193
        $region62: #{tpu_custom_call.1} parent=55 // pred_check_branch
          %325 = sbr.rel (%p323) target = $region64
        $region63: #{tpu_custom_call.1} parent=55 // pred_region
          %326 = dma.done [#allocation6], 1024
        $region64: #{tpu_custom_call.1} parent=55 // pred_fallthru
          _
        %s327 = smul.u32 2, %s25
        %p328 = scmp.lt.s32.totalorder %s327, 7
        %s329 = scalar_select %p328, %s327, 7
        %s330 = smul.addr %s329, 4
        %s331 = scalar_lea.vmem %s0, %s330
        %p332 = pneg %p46
        %p333 = pneg %p43
        %p334 = pneg %p67
        %p335 = pneg %p64
        %p336 = pneg %p88
        %p337 = pneg %p85
        %p338 = pneg %p109
        %p339 = pneg %p106
        %p340 = pneg %p130
        %p341 = pneg %p127
        %p342 = pneg %p151
        %p343 = pneg %p148
        %p344 = pneg %p172
        %p345 = pneg %p169
        %p346 = pneg %p193
        %p347 = pneg %p190
        %p348 = pneg %p214
        %p349 = pneg %p211
        %p350 = pneg %p240
        %p351 = pneg %p237
        %s352 = sand.u32 %s227, 1
        %s353 = scalar_lea.sflag [#allocation4], %s352
        %s354 = sand.u32 %s227, 1
        %s355 = smul.addr %s354, 8
        %s356 = scalar_lea.vmem [#allocation7], %s355
        %s357 = smul.u32 2, %s25
        %p358 = scmp.lt.s32.totalorder %s357, 7
        %s359 = scalar_select %p358, %s357, 7
        %s360 = smul.addr %s359, 4
        %s361 = scalar_lea.vmem %s0, %s360
        %s362 = smul.u32 2, %s25
        %s363 = smul.u32 2, %s25
        %v365 = vld [vmem:[%s361] sm:$0xf]
        %v366 = vld [vmem:[%s361 + $0x4] sm:$0xf]
        %v367 = vunpack.c.l.bf16 %v365
        %v368 = vunpack.c.l.bf16 %v366
        %v369 = vlaneseq
        %v370 = vand.u32 %v369, 127
        %vm371 = vcmp.lt.s32.totalorder %v370, 32
        %v372 = vsel %vm371, 1, 0
        %v373 = vcvt.s32.f32 %v372
        %v374 = vld [vmem:[%s8] sm:$0xff]
        %v375 = vld [vmem:[%s1] sm:$0xf]
        %v376 = vld [vmem:[%s1 + $0x4] sm:$0xf]
        %v377 = vld [vmem:[%s1 + $0x8] sm:$0xf]
        %v378 = vld [vmem:[%s1 + $0xc] sm:$0xf]
        %v379 = vld [vmem:[%s2] sm:$0xff]
        %v380 = vld [vmem:[%s2 + $0x8] sm:$0xff]
        %382 = vset.pattern.permute.xlu0 0
        %383 = vperm.xlu0 %382, %v379
        %v384 = vpop.permute.xlu0 %383
        %387 = vset.pattern.permute.xlu0 0
        %388 = vperm.xlu0 %387, %v380
        %v389 = vpop.permute.xlu0 %388
        %v393 = vunpack.c.l.b16 %v375
        %v394 = vunpack.c.l.b16 %v376
        %v395 = vpack.c.b16 %v394, %v393
        %vm396 = vcmask 64512
        %v398 = vsel %vm396, %v395, 0
        %vm400 = vcmask 1043456
        %v402 = vsel %vm400, %v365, 0
        %404 = vmatprep.subr.bf16.mxu0 0
        %405 = vmatpush1.bf16.msra.mxu0 0
        %406 = vmatprep.subr.bf16.mxu0 0
        %407 = vmatpush1.bf16.msra.mxu0 0
        %408 = vmatprep.subr.bf16.mxu0 0
        %409 = vmatpush1.bf16.msra.mxu0 0
        %410 = vmatprep.subr.bf16.mxu0 0
        %411 = vmatpush1.bf16.msra.mxu0 0
        %412 = vmatprep.subr.bf16.mxu0 0
        %413 = vmatpush1.bf16.msra.mxu0 0
        %414 = vmatprep.subr.bf16.mxu0 0
        %415 = vmatpush1.bf16.msra.mxu0 0
        %416 = vmatprep.subr.bf16.mxu0 0
        %417 = vmatpush1.bf16.msra.mxu0 0
        %418 = vmatprep.subr.bf16.mxu0 0
        %419 = vmatpush1.bf16.msra.mxu0 %v402
        %420 = vmatprep.subr.bf16.mxu0 0
        %421 = vmatpush2.bf16.msra.mxu0 0
        %422 = vmatprep.subr.bf16.mxu0 0
        %423 = vmatpush2.bf16.msra.mxu0 0
        %424 = vmatprep.subr.bf16.mxu0 0
        %425 = vmatpush2.bf16.msra.mxu0 0
        %426 = vmatprep.subr.bf16.mxu0 0
        %427 = vmatpush2.bf16.msra.mxu0 0
        %428 = vmatprep.subr.bf16.mxu0 0
        %429 = vmatpush2.bf16.msra.mxu0 0
        %430 = vmatprep.subr.bf16.mxu0 0
        %431 = vmatpush2.bf16.msra.mxu0 0
        %432 = vmatprep.subr.bf16.mxu0 0
        %433 = vmatpush2.bf16.msra.mxu0 0
        %434 = vmatprep.subr.bf16.mxu0 0
        %435 = vmatpush2.bf16.msra.mxu0 0
        %436 = vmatprep.mubr.bf16.mxu0 0
        %437 = vmatmul.mubr.bf16.gmra.mxu0 %v398
        %v438 = vpop.f32.mrf.mxu0
        %v439 = vadd.f32 %v384, %v438
        %v440 = vpop.f32.mrf.mxu0
        %v441 = vpop.f32.mrf.mxu0
        %v442 = vadd.f32 %v389, %v441
        %v443 = vpop.f32.mrf.mxu0
        %444 = vdwg.mxu0
        %v447 = vunpack.c.l.b16 %v377
        %v448 = vunpack.c.l.b16 %v378
        %v449 = vpack.c.b16 %v448, %v447
        %v451 = vsel %vm396, %v449, 0
        %v454 = vsel %vm400, %v366, 0
        %456 = vmatprep.subr.bf16.mxu0 0
        %457 = vmatpush1.bf16.msra.mxu0 0
        %458 = vmatprep.subr.bf16.mxu0 0
        %459 = vmatpush1.bf16.msra.mxu0 0
        %460 = vmatprep.subr.bf16.mxu0 0
        %461 = vmatpush1.bf16.msra.mxu0 0
        %462 = vmatprep.subr.bf16.mxu0 0
        %463 = vmatpush1.bf16.msra.mxu0 0
        %464 = vmatprep.subr.bf16.mxu0 0
        %465 = vmatpush1.bf16.msra.mxu0 0
        %466 = vmatprep.subr.bf16.mxu0 0
        %467 = vmatpush1.bf16.msra.mxu0 0
        %468 = vmatprep.subr.bf16.mxu0 0
        %469 = vmatpush1.bf16.msra.mxu0 0
        %470 = vmatprep.subr.bf16.mxu0 0
        %471 = vmatpush1.bf16.msra.mxu0 %v454
        %472 = vmatprep.subr.bf16.mxu0 0
        %473 = vmatpush2.bf16.msra.mxu0 0
        %474 = vmatprep.subr.bf16.mxu0 0
        %475 = vmatpush2.bf16.msra.mxu0 0
        %476 = vmatprep.subr.bf16.mxu0 0
        %477 = vmatpush2.bf16.msra.mxu0 0
        %478 = vmatprep.subr.bf16.mxu0 0
        %479 = vmatpush2.bf16.msra.mxu0 0
        %480 = vmatprep.subr.bf16.mxu0 0
        %481 = vmatpush2.bf16.msra.mxu0 0
        %482 = vmatprep.subr.bf16.mxu0 0
        %483 = vmatpush2.bf16.msra.mxu0 0
        %484 = vmatprep.subr.bf16.mxu0 0
        %485 = vmatpush2.bf16.msra.mxu0 0
        %486 = vmatprep.subr.bf16.mxu0 0
        %487 = vmatpush2.bf16.msra.mxu0 0
        %488 = vmatprep.mubr.bf16.mxu0 0
        %489 = vmatmul.mubr.bf16.gmra.mxu0 %v451
        %v490 = vpop.f32.mrf.mxu0
        %v491 = vadd.f32 %v384, %v490
        %v492 = vpop.f32.mrf.mxu0
        %v493 = vpop.f32.mrf.mxu0
        %v494 = vadd.f32 %v389, %v493
        %v495 = vpop.f32.mrf.mxu0
        %496 = vdwg.mxu0
        %v497 = vmax.f32 %v439, 0.0
        %v498 = vmax.f32 %v442, 0.0
        %v499 = vmax.f32 %v491, 0.0
        %v500 = vmax.f32 %v494, 0.0
        %v501 = vld [vmem:[%s3] sm:$0xf]
        %v502 = vld [vmem:[%s3 + $0x4] sm:$0xf]
        %v503 = vpack.c.bf16 %v498, %v497
        %v504 = vpack.c.bf16 %v500, %v499
        %v505 = vld [vmem:[%s4] sm:$0xff]
        %507 = vset.pattern.permute.xlu0 0
        %508 = vperm.xlu0 %507, %v505
        %v509 = vpop.permute.xlu0 %508
        %vm511 = vcmask 130048
        %v513 = vsel %vm511, %v501, 0
        %515 = vmatprep.subr.bf16.mxu0 0
        %516 = vmatpush1.bf16.msra.mxu0 0
        %517 = vmatprep.subr.bf16.mxu0 0
        %518 = vmatpush1.bf16.msra.mxu0 0
        %519 = vmatprep.subr.bf16.mxu0 0
        %520 = vmatpush1.bf16.msra.mxu0 0
        %521 = vmatprep.subr.bf16.mxu0 0
        %522 = vmatpush1.bf16.msra.mxu0 0
        %523 = vmatprep.subr.bf16.mxu0 0
        %524 = vmatpush1.bf16.msra.mxu0 0
        %525 = vmatprep.subr.bf16.mxu0 0
        %526 = vmatpush1.bf16.msra.mxu0 0
        %527 = vmatprep.subr.bf16.mxu0 0
        %528 = vmatpush1.bf16.msra.mxu0 0
        %529 = vmatprep.subr.bf16.mxu0 0
        %530 = vmatpush1.bf16.msra.mxu0 %v503
        %531 = vmatprep.subr.bf16.mxu0 0
        %532 = vmatpush2.bf16.msra.mxu0 0
        %533 = vmatprep.subr.bf16.mxu0 0
        %534 = vmatpush2.bf16.msra.mxu0 0
        %535 = vmatprep.subr.bf16.mxu0 0
        %536 = vmatpush2.bf16.msra.mxu0 0
        %537 = vmatprep.subr.bf16.mxu0 0
        %538 = vmatpush2.bf16.msra.mxu0 0
        %539 = vmatprep.subr.bf16.mxu0 0
        %540 = vmatpush2.bf16.msra.mxu0 0
        %541 = vmatprep.subr.bf16.mxu0 0
        %542 = vmatpush2.bf16.msra.mxu0 0
        %543 = vmatprep.subr.bf16.mxu0 0
        %544 = vmatpush2.bf16.msra.mxu0 0
        %545 = vmatprep.subr.bf16.mxu0 0
        %546 = vmatpush2.bf16.msra.mxu0 0
        %547 = vmatprep.mubr.bf16.mxu0 0
        %548 = vmatmul.mubr.bf16.gmra.mxu0 %v513
        %v549 = vpop.f32.mrf.mxu0
        %v550 = vadd.f32 %v509, %v549
        %v551 = vpop.f32.mrf.mxu0
        %v552 = vpop.f32.mrf.mxu0
        %v553 = vpop.f32.mrf.mxu0
        %554 = vdwg.mxu0
        %v556 = vsel %vm511, %v502, 0
        %558 = vmatprep.subr.bf16.mxu0 0
        %559 = vmatpush1.bf16.msra.mxu0 0
        %560 = vmatprep.subr.bf16.mxu0 0
        %561 = vmatpush1.bf16.msra.mxu0 0
        %562 = vmatprep.subr.bf16.mxu0 0
        %563 = vmatpush1.bf16.msra.mxu0 0
        %564 = vmatprep.subr.bf16.mxu0 0
        %565 = vmatpush1.bf16.msra.mxu0 0
        %566 = vmatprep.subr.bf16.mxu0 0
        %567 = vmatpush1.bf16.msra.mxu0 0
        %568 = vmatprep.subr.bf16.mxu0 0
        %569 = vmatpush1.bf16.msra.mxu0 0
        %570 = vmatprep.subr.bf16.mxu0 0
        %571 = vmatpush1.bf16.msra.mxu0 0
        %572 = vmatprep.subr.bf16.mxu0 0
        %573 = vmatpush1.bf16.msra.mxu0 %v504
        %574 = vmatprep.subr.bf16.mxu0 0
        %575 = vmatpush2.bf16.msra.mxu0 0
        %576 = vmatprep.subr.bf16.mxu0 0
        %577 = vmatpush2.bf16.msra.mxu0 0
        %578 = vmatprep.subr.bf16.mxu0 0
        %579 = vmatpush2.bf16.msra.mxu0 0
        %580 = vmatprep.subr.bf16.mxu0 0
        %581 = vmatpush2.bf16.msra.mxu0 0
        %582 = vmatprep.subr.bf16.mxu0 0
        %583 = vmatpush2.bf16.msra.mxu0 0
        %584 = vmatprep.subr.bf16.mxu0 0
        %585 = vmatpush2.bf16.msra.mxu0 0
        %586 = vmatprep.subr.bf16.mxu0 0
        %587 = vmatpush2.bf16.msra.mxu0 0
        %588 = vmatprep.subr.bf16.mxu0 0
        %589 = vmatpush2.bf16.msra.mxu0 0
        %590 = vmatprep.mubr.bf16.mxu0 0
        %591 = vmatmul.mubr.bf16.gmra.mxu0 %v556
        %v592 = vpop.f32.mrf.mxu0
        %v593 = vadd.f32 %v509, %v592
        %v594 = vpop.f32.mrf.mxu0
        %v595 = vpop.f32.mrf.mxu0
        %v596 = vpop.f32.mrf.mxu0
        %597 = vdwg.mxu0
        %v598 = vadd.f32 %v550, %v367
        %v599 = vadd.f32 %v593, %v368
        %v600 = vmul.f32 %v598, %v373
        %v601 = vmul.f32 %v599, %v373
        %602 = vadd.xlane.f32.xlu0 %v600
        %v603 = vpop.xlane.xlu0 %602
        %604 = vadd.xlane.f32.xlu0 %v601
        %v605 = vpop.xlane.xlu0 %604
        %v606 = vmul.f32 %v603, 0.03125
        %v607 = vmul.f32 %v605, 0.03125
        %v608 = vmul.f32 %v600, %v600
        %v609 = vmul.f32 %v601, %v601
        %610 = vadd.xlane.f32.xlu0 %v608
        %v611 = vpop.xlane.xlu0 %610
        %612 = vadd.xlane.f32.xlu0 %v609
        %v613 = vpop.xlane.xlu0 %612
        %v614 = vmul.f32 %v611, 0.03125
        %v615 = vmul.f32 %v613, 0.03125
        %v616 = vmul.f32 %v606, %v606
        %v617 = vmul.f32 %v607, %v607
        %v618 = vsub.f32 %v614, %v616
        %v619 = vsub.f32 %v615, %v617
        %v620 = vadd.f32 %v618, 1e-05
        %v621 = vadd.f32 %v619, 1e-05
        %v622 = vrsqrt.pop %v620
        %v623 = vrsqrt.pop %v621
        %v624 = vsub.f32 %v600, %v606
        %v625 = vsub.f32 %v601, %v607
        %v626 = vmul.f32 %v624, %v622
        %v627 = vmul.f32 %v625, %v623
        %v628 = vlaneseq
        %v629 = vshrl.u32 %v628, 7
        %v630 = vsub.s32 1, %v629
        %v631 = vrot.slane %v374, %v630
        %v632 = vmul.f32 %v626, %v631
        %v633 = vmul.f32 %v627, %v631
        %v634 = vlaneseq
        %v635 = vshrl.u32 %v634, 7
        %v636 = vsub.s32 2, %v635
        %v637 = vrot.slane %v374, %v636
        %v638 = vadd.f32 %v632, %v637
        %v639 = vadd.f32 %v633, %v637
        %v640 = vpack.c.bf16 %v639, %v638
        %v641 = vld [vmem:[#allocation2] sm:$0xf]
        %v642 = vld [vmem:[#allocation2 + $0x4] sm:$0xf]
        %v643 = vld [vmem:[#allocation2 + $0x8] sm:$0xf]
        %v644 = vld [vmem:[#allocation2 + $0xc] sm:$0xf]
        %v645 = vld [vmem:[#allocation2 + $0x10] sm:$0xf]
        %v646 = vld [vmem:[#allocation2 + $0x14] sm:$0xf]
        %v647 = vld [vmem:[#allocation2 + $0x18] sm:$0xf]
        %v648 = vld [vmem:[#allocation2 + $0x1c] sm:$0xf]
        %v649 = vld [vmem:[#allocation2 + $0x20] sm:$0xf]
        %v650 = vld [vmem:[#allocation2 + $0x24] sm:$0xf]
        %v651 = vld [vmem:[#allocation2 + $0x28] sm:$0xf]
        %v652 = vld [vmem:[#allocation2 + $0x2c] sm:$0xf]
        %v653 = vld [vmem:[#allocation2 + $0x30] sm:$0xf]
        %v654 = vld [vmem:[#allocation2 + $0x34] sm:$0xf]
        %v655 = vld [vmem:[#allocation2 + $0x38] sm:$0xf]
        %v656 = vld [vmem:[#allocation2 + $0x3c] sm:$0xf]
        %v657 = vld [vmem:[%s6] sm:$0x1]
        %v659 = vlaneseq
        %v660 = vshrl.u32 %v659, 7
        %v661 = vsub.s32 0, %v660
        %v662 = vrot.slane %v657, %v661
        %v680 = vunpack.c.l.b16 %v641
        %v681 = vunpack.c.l.b16 %v642
        %v682 = vunpack.c.l.b16 %v643
        %v683 = vunpack.c.l.b16 %v644
        %v684 = vunpack.c.l.b16 %v645
        %v685 = vunpack.c.l.b16 %v646
        %v686 = vunpack.c.l.b16 %v647
        %v687 = vunpack.c.l.b16 %v648
        %v688 = vunpack.c.l.b16 %v649
        %v689 = vunpack.c.l.b16 %v650
        %v690 = vunpack.c.l.b16 %v651
        %v691 = vunpack.c.l.b16 %v652
        %v692 = vunpack.c.l.b16 %v653
        %v693 = vunpack.c.l.b16 %v654
        %v694 = vunpack.c.l.b16 %v655
        %v695 = vunpack.c.l.b16 %v656
        %v696 = vpack.c.b16 %v681, %v680
        %v697 = vpack.c.b16 %v683, %v682
        %v698 = vpack.c.b16 %v685, %v684
        %v699 = vpack.c.b16 %v687, %v686
        %v700 = vpack.c.b16 %v689, %v688
        %v701 = vpack.c.b16 %v691, %v690
        %v702 = vpack.c.b16 %v693, %v692
        %v703 = vpack.c.b16 %v695, %v694
        %712 = vmatprep.subr.bf16.mxu0 0
        %713 = vmatpush1.bf16.msra.mxu0 %v703
        %714 = vmatprep.subr.bf16.mxu0 0
        %715 = vmatpush1.bf16.msra.mxu0 %v702
        %716 = vmatprep.subr.bf16.mxu0 0
        %717 = vmatpush1.bf16.msra.mxu0 %v701
        %718 = vmatprep.subr.bf16.mxu0 0
        %719 = vmatpush1.bf16.msra.mxu0 %v700
        %720 = vmatprep.subr.bf16.mxu0 0
        %721 = vmatpush1.bf16.msra.mxu0 %v699
        %722 = vmatprep.subr.bf16.mxu0 0
        %723 = vmatpush1.bf16.msra.mxu0 %v698
        %724 = vmatprep.subr.bf16.mxu0 0
        %725 = vmatpush1.bf16.msra.mxu0 %v697
        %726 = vmatprep.subr.bf16.mxu0 0
        %727 = vmatpush1.bf16.msra.mxu0 %v696
        %728 = vmatprep.subr.bf16.mxu0 0
        %729 = vmatpush2.bf16.msra.mxu0 0
        %730 = vmatprep.subr.bf16.mxu0 0
        %731 = vmatpush2.bf16.msra.mxu0 0
        %732 = vmatprep.subr.bf16.mxu0 0
        %733 = vmatpush2.bf16.msra.mxu0 0
        %734 = vmatprep.subr.bf16.mxu0 0
        %735 = vmatpush2.bf16.msra.mxu0 0
        %736 = vmatprep.subr.bf16.mxu0 0
        %737 = vmatpush2.bf16.msra.mxu0 0
        %738 = vmatprep.subr.bf16.mxu0 0
        %739 = vmatpush2.bf16.msra.mxu0 0
        %740 = vmatprep.subr.bf16.mxu0 0
        %741 = vmatpush2.bf16.msra.mxu0 0
        %742 = vmatprep.subr.bf16.mxu0 0
        %743 = vmatpush2.bf16.msra.mxu0 0
        %744 = vmatprep.mubr.bf16.mxu0 0
        %745 = vmatmul.mubr.bf16.gmra.mxu0 %v640
        %v746 = vpop.f32.mrf.mxu0
        %v747 = vadd.f32 %v662, %v746
        %v748 = vpop.f32.mrf.mxu0
        %v749 = vpop.f32.mrf.mxu0
        %v750 = vadd.f32 %v662, %v749
        %v751 = vpop.f32.mrf.mxu0
        %752 = vdwg.mxu0
        %v753 = vmax.f32 %v747, 0.0
        %v754 = vmax.f32 %v750, 0.0
        %v755 = vpack.c.bf16 %v754, %v753
        %v756 = vld [vmem:[#allocation5] sm:$0xf]
        %v757 = vld [vmem:[#allocation5 + $0x4] sm:$0xf]
        %v758 = vld [vmem:[#allocation5 + $0x8] sm:$0xf]
        %v759 = vld [vmem:[#allocation5 + $0xc] sm:$0xf]
        %v760 = vld [vmem:[#allocation5 + $0x10] sm:$0xf]
        %v761 = vld [vmem:[#allocation5 + $0x14] sm:$0xf]
        %v762 = vld [vmem:[#allocation5 + $0x18] sm:$0xf]
        %v763 = vld [vmem:[#allocation5 + $0x1c] sm:$0xf]
        %v764 = vld [vmem:[#allocation5 + $0x20] sm:$0xf]
        %v765 = vld [vmem:[#allocation5 + $0x24] sm:$0xf]
        %v766 = vld [vmem:[#allocation5 + $0x28] sm:$0xf]
        %v767 = vld [vmem:[#allocation5 + $0x2c] sm:$0xf]
        %v768 = vld [vmem:[#allocation5 + $0x30] sm:$0xf]
        %v769 = vld [vmem:[#allocation5 + $0x34] sm:$0xf]
        %v770 = vld [vmem:[#allocation5 + $0x38] sm:$0xf]
        %v771 = vld [vmem:[#allocation5 + $0x3c] sm:$0xf]
        %v772 = vlaneseq
        %v773 = vshrl.u32 %v772, 7
        %v774 = vsub.s32 0, %v773
        %v775 = vrot.slane %v374, %v774
        %v792 = vunpack.c.l.b16 %v756
        %v793 = vunpack.c.l.b16 %v757
        %v794 = vunpack.c.l.b16 %v758
        %v795 = vunpack.c.l.b16 %v759
        %v796 = vunpack.c.l.b16 %v760
        %v797 = vunpack.c.l.b16 %v761
        %v798 = vunpack.c.l.b16 %v762
        %v799 = vunpack.c.l.b16 %v763
        %v800 = vunpack.c.l.b16 %v764
        %v801 = vunpack.c.l.b16 %v765
        %v802 = vunpack.c.l.b16 %v766
        %v803 = vunpack.c.l.b16 %v767
        %v804 = vunpack.c.l.b16 %v768
        %v805 = vunpack.c.l.b16 %v769
        %v806 = vunpack.c.l.b16 %v770
        %v807 = vunpack.c.l.b16 %v771
        %v808 = vpack.c.b16 %v793, %v792
        %v809 = vpack.c.b16 %v795, %v794
        %v810 = vpack.c.b16 %v797, %v796
        %v811 = vpack.c.b16 %v799, %v798
        %v812 = vpack.c.b16 %v801, %v800
        %v813 = vpack.c.b16 %v803, %v802
        %v814 = vpack.c.b16 %v805, %v804
        %v815 = vpack.c.b16 %v807, %v806
        %824 = vmatprep.subr.bf16.mxu0 0
        %825 = vmatpush1.bf16.msra.mxu0 %v815
        %826 = vmatprep.subr.bf16.mxu0 0
        %827 = vmatpush1.bf16.msra.mxu0 %v814
        %828 = vmatprep.subr.bf16.mxu0 0
        %829 = vmatpush1.bf16.msra.mxu0 %v813
        %830 = vmatprep.subr.bf16.mxu0 0
        %831 = vmatpush1.bf16.msra.mxu0 %v812
        %832 = vmatprep.subr.bf16.mxu0 0
        %833 = vmatpush1.bf16.msra.mxu0 %v811
        %834 = vmatprep.subr.bf16.mxu0 0
        %835 = vmatpush1.bf16.msra.mxu0 %v810
        %836 = vmatprep.subr.bf16.mxu0 0
        %837 = vmatpush1.bf16.msra.mxu0 %v809
        %838 = vmatprep.subr.bf16.mxu0 0
        %839 = vmatpush1.bf16.msra.mxu0 %v808
        %840 = vmatprep.subr.bf16.mxu0 0
        %841 = vmatpush2.bf16.msra.mxu0 0
        %842 = vmatprep.subr.bf16.mxu0 0
        %843 = vmatpush2.bf16.msra.mxu0 0
        %844 = vmatprep.subr.bf16.mxu0 0
        %845 = vmatpush2.bf16.msra.mxu0 0
        %846 = vmatprep.subr.bf16.mxu0 0
        %847 = vmatpush2.bf16.msra.mxu0 0
        %848 = vmatprep.subr.bf16.mxu0 0
        %849 = vmatpush2.bf16.msra.mxu0 0
        %850 = vmatprep.subr.bf16.mxu0 0
        %851 = vmatpush2.bf16.msra.mxu0 0
        %852 = vmatprep.subr.bf16.mxu0 0
        %853 = vmatpush2.bf16.msra.mxu0 0
        %854 = vmatprep.subr.bf16.mxu0 0
        %855 = vmatpush2.bf16.msra.mxu0 0
        %856 = vmatprep.mubr.bf16.mxu0 0
        %857 = vmatmul.mubr.bf16.gmra.mxu0 %v755
        %v858 = vpop.f32.mrf.mxu0
        %v859 = vadd.f32 %v775, %v858
        %v860 = vpop.f32.mrf.mxu0
        %v861 = vpop.f32.mrf.mxu0
        %v862 = vadd.f32 %v775, %v861
        %v863 = vpop.f32.mrf.mxu0
        %864 = vdwg.mxu0
        %v865 = vadd.f32 %v859, %v638
        %v866 = vadd.f32 %v862, %v639
        %867 = vadd.xlane.f32.xlu0 %v865
        %v868 = vpop.xlane.xlu0 %867
        %869 = vadd.xlane.f32.xlu0 %v866
        %v870 = vpop.xlane.xlu0 %869
        %v871 = vmul.f32 %v868, 0.03125
        %v872 = vmul.f32 %v870, 0.03125
        %v873 = vmul.f32 %v865, %v865
        %v874 = vmul.f32 %v866, %v866
        %875 = vadd.xlane.f32.xlu0 %v873
        %v876 = vpop.xlane.xlu0 %875
        %877 = vadd.xlane.f32.xlu0 %v874
        %v878 = vpop.xlane.xlu0 %877
        %v879 = vmul.f32 %v876, 0.03125
        %v880 = vmul.f32 %v878, 0.03125
        %v881 = vmul.f32 %v871, %v871
        %v882 = vmul.f32 %v872, %v872
        %v883 = vsub.f32 %v879, %v881
        %v884 = vsub.f32 %v880, %v882
        %v885 = vadd.f32 %v883, 1e-05
        %v886 = vadd.f32 %v884, 1e-05
        %v887 = vrsqrt.pop %v885
        %v888 = vrsqrt.pop %v886
        %v889 = vsub.f32 %v865, %v871
        %v890 = vsub.f32 %v866, %v872
        %v891 = vmul.f32 %v889, %v887
        %v892 = vmul.f32 %v890, %v888
        %v893 = vlaneseq
        %v894 = vshrl.u32 %v893, 7
        %v895 = vsub.s32 3, %v894
        %v896 = vrot.slane %v374, %v895
        %v897 = vmul.f32 %v891, %v896
        %v898 = vmul.f32 %v892, %v896
        %v899 = vlaneseq
        %v900 = vshrl.u32 %v899, 7
        %v901 = vsub.s32 4, %v900
        %v902 = vrot.slane %v374, %v901
        %v903 = vadd.f32 %v897, %v902
        %v904 = vadd.f32 %v898, %v902
        %v905 = vpack.c.bf16 %v903, %v903
        %v906 = vpack.c.bf16 %v904, %v904
        %907 = vst [vmem:[%s356] sm:$0xf] %v905
        %908 = vst [vmem:[%s356 + $0x4] sm:$0xf] %v906
        %s909 = sand.u32 %s227, 1
        %s910 = scalar_lea.sflag [#allocation4], %s909
        %s911 = sand.u32 %s227, 1
        %s912 = smul.addr %s911, 8
        %s913 = scalar_lea.vmem [#allocation7], %s912
        // Predicated region
        $region65: #{tpu_custom_call.1} parent=55 // pred_check
          %p914 = pneg %p237
        $region66: #{tpu_custom_call.1} parent=55 // pred_check_branch
          %916 = sbr.rel (%p914) target = $region68
        $region67: #{tpu_custom_call.1} parent=55 // pred_region
          %s917 = smul.u32 2, %s25
          %s919 = ssub.s32 128, 128
          %920 = vsyncadd %s910, %s919
          %s921 = smul.addr %s917, 64
          %s922 = scalar_lea.hbm %s9, %s921
          %s923 = sshll.u32 %s913, 4
          %s924 = int_to_ptr.vmem [resolvable:$true] %s923
          %929 = dma.vmem_to_hbm [thread:$0]  %s924, 128, %s922, %s910, 64, 64, 4
        $region68: #{tpu_custom_call.1} parent=55 // pred_fallthru
          _
      $region56: #{tpu_custom_call.1} parent=5 // pred_fallthru
        _
      %p930 = scmp.le.s32.totalorder 2, %s20
      // Predicated region
      $region69: #{tpu_custom_call.1} parent=5 // pred_check
        %p931 = pneg %p930
      $region70: #{tpu_custom_call.1} parent=5 // pred_check_branch
        %933 = sbr.rel (%p931) target = $region72
      $region71: #{tpu_custom_call.1} parent=5 // pred_region
        %s934 = ssub.s32 %s20, 2
        // Predicated region
        $region73: #{tpu_custom_call.1} parent=71 // pred_check
          %p935 = pneg %p243
        $region74: #{tpu_custom_call.1} parent=71 // pred_check_branch
          %937 = sbr.rel (%p935) target = $region76
        $region75: #{tpu_custom_call.1} parent=71 // pred_region
          %s938 = sand.u32 %s228, 1
          %s939 = scalar_lea.sflag [#allocation4], %s938
          %s940 = sand.u32 %s228, 1
          %s941 = smul.addr %s940, 8
          %s942 = scalar_lea.vmem [#allocation7], %s941
          %943 = dma.done %s939, 128
        $region76: #{tpu_custom_call.1} parent=71 // pred_fallthru
          _
      $region72: #{tpu_custom_call.1} parent=5 // pred_fallthru
        _
    $region6: #{tpu_custom_call.1} parent=1 // loop_footer
      %s24 = sadd.s32 1, %s20
    $region7: #{tpu_custom_call.1} parent=1 // loop_footer_branch
      %19 = sbr.rel target = $region3
    $region8: #{tpu_custom_call.1} parent=1 // loop_exit
      _
    %944 = vsyncpa [#allocation3], 1
    %s945 = scalar_lea.sflag [#allocation3], 1
    %946 = vsyncpa %s945, 1
    %947 = vsyncpa [#allocation6], 1
    %948 = vsyncpa [#allocation4], 1
    %s949 = scalar_lea.sflag [#allocation4], 1
    %950 = vsyncpa %s949, 1

</llo_original>
